<compile_context>
chip_gen: v7x
topology: tpu7x:2x2x1
jax: 0.10.0
libtpu: 0.0.40
codegen_flags: <defaults>
</compile_context>

<pallas_src>
import functools
import math

import jax
import jax.numpy as jnp
from jax import lax
from jax.experimental import pallas as pl
from jax.experimental.pallas import tpu as pltpu

LEAKY_SLOPE = 0.01  # nn.LeakyReLU default negative_slope
LANE = 128

# dot_general dimension numbers (no materialized transposes).
DN_NN = (((1,), (0,)), ((), ()))   # a @ b
DN_TN = (((0,), (0,)), ((), ()))   # a.T @ b
DN_NT = (((1,), (1,)), ((), ()))   # a @ b.T


def _vmem():
    return pl.BlockSpec(memory_space=pltpu.MemorySpace.VMEM)


def _round_up(n, m):
    return ((n + m - 1) // m) * m


def _leaky(y):
    return jnp.where(y >= 0.0, y, LEAKY_SLOPE * y)


def _sigmoid(z):
    # EUP-friendly sigmoid: exp + approx reciprocal (no VPU divide).
    return pl.reciprocal(1.0 + jnp.exp(-z), approx=True)


def _mm(a, b, dn):
    # bf16 MXU matmul with f32 accumulation; transposed contractions are
    # expressed via dimension_numbers instead of XLU transposes.
    return lax.dot_general(a.astype(jnp.bfloat16), b.astype(jnp.bfloat16),
                           dimension_numbers=dn,
                           preferred_element_type=jnp.float32)


# --------------------------- fused forward kernel ---------------------------

def _build_fused_kernel(num_layers, er, ec, erp, ecp, scale_param_cols,
                        num_knn_edges):
    """Builds the fused BiGraphAutoEncoder forward kernel (all shapes static)."""
    inv_sqrt_er = 1.0 / math.sqrt(er)
    inv_sqrt_ec = 1.0 / math.sqrt(ec)
    inv_e = 1.0 / float(num_knn_edges)
    inv_em1 = 1.0 / max(float(num_knn_edges) - 1.0, 1.0)  # unbiased std denom

    def kernel(x_ref, a_ppi_ref, m_ppi_ref, a_knn_ref, m_knn_ref,
               rowlin_w_ref, rowlin_b_ref,
               cols_w_ref, cols_b_ref, rows_w_ref, rows_b_ref,
               rgcn_w_ref, rgcn_b_ref, rattn_w_ref, rattn_b_ref,
               cgcn_w_ref, cgcn_b_ref, cattn_w_ref, cattn_b_ref,
               d1_w_ref, d1_b_ref, d2_w_ref, d2_b_ref, d3_w_ref, d3_b_ref,
               zrows_ref, feat_ref):
        a_ppi = a_ppi_ref[...]     # (C, C) bf16  (GCN-normalized, self loops)
        m_ppi = m_ppi_ref[...]     # (C, C) f32   (0/1 edge mask)
        a_knn = a_knn_ref[...]     # (R, R) bf16
        m_knn = m_knn_ref[...]     # (R, R) f32

        # --- MutaelEncoder: row_linear (add_linear_rows=True) ----------------
        emb = _mm(x_ref[...], rowlin_w_ref[...], DN_NN) + rowlin_b_ref[...]  # (C,R)

        # --- MutaelEncoder GCN loop; emb stays in (C, R) orientation ---------
        #   cols layer (GCN over knn graph on emb^T), rewritten transpose-free:
        #     leaky(Wc^T @ emb @ Aknn^T + bc)
        #   rows layer (GCN over ppi graph):
        #     leaky(Appi @ (emb @ Wr) + br)
        def gcn_layer(emb, w_c, b_c, w_r, b_r):
            p = _mm(w_c, emb, DN_TN)                          # (C, R)
            emb = _leaky(_mm(p, a_knn, DN_NT) + b_c)          # cols layer
            t = _mm(emb, w_r, DN_NN)                          # (C, R)
            return _leaky(_mm(a_ppi, t, DN_NN) + b_r)         # rows layer

        if num_layers <= 4:
            for i in range(num_layers):
                emb = gcn_layer(emb, cols_w_ref[i], cols_b_ref[i],
                                rows_w_ref[i], rows_b_ref[i])
        else:
            # bounded vreg live ranges for deep encoders (stacked weights,
            # dynamic leading-axis ref indexing).
            emb = lax.fori_loop(
                0, num_layers,
                lambda i, e: gcn_layer(e, cols_w_ref[i], cols_b_ref[i],
                                       rows_w_ref[i], rows_b_ref[i]),
                emb)

        # --- rows DimEncoder (scale_param=None -> masked softmax attention) --
        h = _leaky(_mm(a_ppi, _mm(emb, rgcn_w_ref[...], DN_NN), DN_NN)
                   + rgcn_b_ref[...])                          # (C, IR)
        qkvs = _mm(h, rattn_w_ref[...], DN_NN) + rattn_b_ref[...]   # (C, 4*ERP)
        q, k = qkvs[:, 0:erp], qkvs[:, erp:2 * erp]            # 128-aligned
        v, skip = qkvs[:, 2 * erp:3 * erp], qkvs[:, 3 * erp:4 * erp]
        s = _mm(q, k, DN_NT) * inv_sqrt_er                     # (C, C)
        neg = (m_ppi - 1.0) * jnp.float32(1e30)                # additive mask
        s_m = s + neg
        row_max = jnp.max(s_m, axis=-1, keepdims=True)
        e = jnp.exp(s_m - row_max) * m_ppi
        denom = jnp.maximum(jnp.sum(e, axis=-1, keepdims=True), 1e-16)
        alpha = e * pl.reciprocal(denom, approx=True)
        zrows_ref[...] = _mm(alpha, v, DN_NN) + skip           # (C, ERP)

        # --- cols DimEncoder (scale_param=1.5 -> scaled sigmoid attention) ---
        h = _leaky(_mm(a_knn, _mm(emb, cgcn_w_ref[...], DN_TN), DN_NN)
                   + cgcn_b_ref[...])                          # (R, IC)
        qkvs = _mm(h, cattn_w_ref[...], DN_NN) + cattn_b_ref[...]   # (R, 4*ECP)
        q, k = qkvs[:, 0:ecp], qkvs[:, ecp:2 * ecp]
        v, skip = qkvs[:, 2 * ecp:3 * ecp], qkvs[:, 3 * ecp:4 * ecp]
        s = _mm(q, k, DN_NT) * inv_sqrt_ec                     # (R, R)
        # unbiased std over existing edges (dense-mask entries).
        mean = jnp.sum(s * m_knn) * inv_e
        var = jnp.sum(m_knn * (s - mean) ** 2) * inv_em1
        zsc = s * (jnp.float32(scale_param_cols)
                   * lax.rsqrt(jnp.maximum(var, 1e-12)))       # clamped rsqrt
        alpha = m_knn * _sigmoid(zsc)
        z_cols = _mm(alpha, v, DN_NN) + skip                   # (R, ECP)

        # --- FatureDecoder (cd=False): 3 x (Linear -> ReLU), dropout=identity
        h = jnp.maximum(_mm(z_cols, d1_w_ref[...], DN_NN) + d1_b_ref[...], 0.0)
        h = jnp.maximum(_mm(h, d2_w_ref[...], DN_NN) + d2_b_ref[...], 0.0)
        feat_ref[...] = jnp.maximum(
            _mm(h, d3_w_ref[...], DN_NN) + d3_b_ref[...], 0.0)  # (R, CP)

    return kernel


# ------------------------------- graph glue --------------------------------

def dense_mask(edge_index, num_nodes):
    src, dst = edge_index[0], edge_index[1]
    return jnp.zeros((num_nodes, num_nodes), jnp.float32).at[dst, src].set(1.0)


def precompute_graph(edge_index, num_nodes):
    """Densify a static graph ONCE: (gcn-normalized adjacency, 0/1 mask)."""
    m = dense_mask(edge_index, num_nodes)
    a = m + jnp.eye(num_nodes, dtype=jnp.float32)
    deg = jnp.sum(a, axis=1)
    dinv = 1.0 / jnp.sqrt(jnp.maximum(deg, 1.0))
    return dinv[:, None] * a * dinv[None, :], m


def ring_edges(n):
    src = jnp.arange(n, dtype=jnp.int32)
    dst = (src + 1) % n
    return jnp.stack([jnp.concatenate([src, dst]),
                      jnp.concatenate([dst, src])]).astype(jnp.int32)


# ------------------------------- parameters --------------------------------

def _lin_init(key, fan_in, fan_out, scale=0.1):
    kw, kb = jax.random.split(key)
    return {"w": jax.random.normal(kw, (fan_in, fan_out), jnp.float32) * scale,
            "b": jax.random.normal(kb, (1, fan_out), jnp.float32) * scale}


def _attn_init(key, fan_in, fan_out, scale=0.1):
    # q | k | v | skip merged into a single weight / bias (one MXU matmul).
    kw, kb = jax.random.split(key)
    return {"w": jax.random.normal(kw, (fan_in, 4 * fan_out), jnp.float32) * scale,
            "b": jax.random.normal(kb, (1, 4 * fan_out), jnp.float32) * scale}


def init_params(key, col_dim, row_dim, inter_row_dim, embd_row_dim,
                inter_col_dim, embd_col_dim, num_layers):
    keys = jax.random.split(key, 8 + 2 * num_layers)
    cols = [_lin_init(keys[1 + i], col_dim, col_dim) for i in range(num_layers)]
    rows = [_lin_init(keys[1 + num_layers + i], row_dim, row_dim)
            for i in range(num_layers)]
    return {
        "row_linear": _lin_init(keys[0], row_dim, row_dim),
        "cols_w": jnp.stack([c["w"] for c in cols]),        # (L, C, C)
        "cols_b": jnp.concatenate([c["b"] for c in cols]),  # (L, C)
        "rows_w": jnp.stack([r["w"] for r in rows]),        # (L, R, R)
        "rows_b": jnp.concatenate([r["b"] for r in rows]),  # (L, R)
        "rows_gcn": _lin_init(keys[1 + 2 * num_layers], row_dim, inter_row_dim),
        "rows_attn": _attn_init(keys[2 + 2 * num_layers], inter_row_dim, embd_row_dim),
        "cols_gcn": _lin_init(keys[3 + 2 * num_layers], col_dim, inter_col_dim),
        "cols_attn": _attn_init(keys[4 + 2 * num_layers], inter_col_dim, embd_col_dim),
        "dec1": _lin_init(keys[5 + 2 * num_layers], embd_col_dim, inter_col_dim),
        "dec2": _lin_init(keys[6 + 2 * num_layers], inter_col_dim, inter_col_dim),
        "dec3": _lin_init(keys[7 + 2 * num_layers], inter_col_dim, col_dim),
    }


# ------------------------------ param packing -------------------------------

def _pad_axis(a, axis, new_size):
    pad = new_size - a.shape[axis]
    if pad <= 0:
        return a
    widths = [(0, 0)] * a.ndim
    widths[axis] = (0, pad)
    return jnp.pad(a, widths)


def _pack_attn(w, b, e, ep):
    # pad each of q/k/v/skip to a 128-lane stride -> lane-aligned slices and
    # lane-dense attention outputs; padded columns are exactly zero.
    fan_in = w.shape[0]
    w4 = _pad_axis(w.reshape(fan_in, 4, e), 2, ep).reshape(fan_in, 4 * ep)
    b4 = _pad_axis(b.reshape(1, 4, e), 2, ep).reshape(1, 4 * ep)
    return w4, b4


def pack_params(params, *, embd_row_dim, embd_col_dim):
    """Pad / stack / cast parameters into kernel operands (done ONCE)."""
    bf16 = jnp.bfloat16
    er, ec = embd_row_dim, embd_col_dim
    erp, ecp = _round_up(er, LANE), _round_up(ec, LANE)
    col_dim = params["dec3"]["w"].shape[1]
    cp = _round_up(col_dim, LANE)

    rattn_w, rattn_b = _pack_attn(params["rows_attn"]["w"],
                                  params["rows_attn"]["b"], er, erp)
    cattn_w, cattn_b = _pack_attn(params["cols_attn"]["w"],
                                  params["cols_attn"]["b"], ec, ecp)

    return {
        "rowlin_w": params["row_linear"]["w"].astype(bf16),
        "rowlin_b": params["row_linear"]["b"],
        "cols_w": params["cols_w"].astype(bf16),        # (L, C, C)
        "cols_b": params["cols_b"][:, :, None],         # (L, C, 1) sublane bias
        "rows_w": params["rows_w"].astype(bf16),        # (L, R, R)
        "rows_b": params["rows_b"][:, None, :],         # (L, 1, R) lane bias
        "rgcn_w": params["rows_gcn"]["w"].astype(bf16),
        "rgcn_b": params["rows_gcn"]["b"],
        "rattn_w": rattn_w.astype(bf16), "rattn_b": rattn_b,
        "cgcn_w": params["cols_gcn"]["w"].astype(bf16),
        "cgcn_b": params["cols_gcn"]["b"],
        "cattn_w": cattn_w.astype(bf16), "cattn_b": cattn_b,
        "d1_w": _pad_axis(params["dec1"]["w"], 0, ecp).astype(bf16),  # (ECP, IC)
        "d1_b": params["dec1"]["b"],
        "d2_w": params["dec2"]["w"].astype(bf16),
        "d2_b": params["dec2"]["b"],
        "d3_w": _pad_axis(params["dec3"]["w"], 1, cp).astype(bf16),   # (IC, CP)
        "d3_b": _pad_axis(params["dec3"]["b"], 1, cp),
    }


# -------------------------------- forward ----------------------------------

@functools.partial(jax.jit,
                   static_argnames=("num_layers", "num_knn_edges",
                                    "embd_row_dim", "embd_col_dim",
                                    "scale_param_cols"))
def bigraph_forward(packed, x, a_ppi, m_ppi, a_knn, m_knn, ppi_edge_index, *,
                    num_layers, num_knn_edges, embd_row_dim, embd_col_dim,
                    scale_param_cols=1.5):
    C, R = x.shape
    erp = packed["rattn_w"].shape[1] // 4
    ecp = packed["cattn_w"].shape[1] // 4
    cp = packed["d3_w"].shape[1]

    kernel = _build_fused_kernel(num_layers, embd_row_dim, embd_col_dim,
                                 erp, ecp, scale_param_cols, num_knn_edges)

    operands = (x.astype(jnp.bfloat16), a_ppi, m_ppi, a_knn, m_knn,
                packed["rowlin_w"], packed["rowlin_b"],
                packed["cols_w"], packed["cols_b"],
                packed["rows_w"], packed["rows_b"],
                packed["rgcn_w"], packed["rgcn_b"],
                packed["rattn_w"], packed["rattn_b"],
                packed["cgcn_w"], packed["cgcn_b"],
                packed["cattn_w"], packed["cattn_b"],
                packed["d1_w"], packed["d1_b"],
                packed["d2_w"], packed["d2_b"],
                packed["d3_w"], packed["d3_b"])

    out_shapes = (jax.ShapeDtypeStruct((C, erp), jnp.float32),   # z_rows (padded)
                  jax.ShapeDtypeStruct((R, cp), jnp.float32))    # decoded feats

    # Explicit scoped-VMEM limit sized to the (tiny) operand footprint, with
    # headroom for intermediates; never above the conservative 32 MiB default.
    footprint = sum(int(o.size) * o.dtype.itemsize for o in operands)
    footprint += sum(int(math.prod(s.shape)) * s.dtype.itemsize
                     for s in out_shapes)
    vmem_limit = int(min(max(6 * footprint + (2 << 20), 16 << 20), 32 << 20))

    z_rows_p, feat_p = pl.pallas_call(
        kernel,
        out_shape=out_shapes,
        in_specs=[_vmem()] * len(operands),
        out_specs=(_vmem(), _vmem()),
        compiler_params=pltpu.CompilerParams(vmem_limit_bytes=vmem_limit),
    )(*operands)

    # Edge-wise InnerProductDecoder: O(E * embd) gather + dot + exact sigmoid
    # instead of a dense (C, C) sigmoid(Z Z^T) matmul and HBM writeback.
    z = z_rows_p[:, :embd_row_dim]
    src, dst = ppi_edge_index[0], ppi_edge_index[1]
    out_network = jax.nn.sigmoid(jnp.sum(z[src] * z[dst], axis=-1))
    out_features = feat_p[:, :C]
    return out_network, out_features


# --------------------------------- main -------------------------------------

if __name__ == "__main__":
    # x has shape (col_dim, row_dim): ppi graph is over the col_dim nodes,
    # knn graph is over the row_dim nodes (per MutaelEncoder semantics).
    col_dim, row_dim = 16, 24
    inter_row_dim, embd_row_dim = 32, 8
    inter_col_dim, embd_col_dim = 32, 8
    num_layers = 2

    key = jax.random.PRNGKey(0)
    kx, kp = jax.random.split(key)
    x = jax.random.normal(kx, (col_dim, row_dim), jnp.float32)
    ppi_edge_index = ring_edges(col_dim)   # (2, 32)
    knn_edge_index = ring_edges(row_dim)   # (2, 48)

    # Static-graph densification hoisted out of the per-forward path.
    a_ppi, m_ppi = precompute_graph(ppi_edge_index, col_dim)
    a_knn, m_knn = precompute_graph(knn_edge_index, row_dim)
    a_ppi = a_ppi.astype(jnp.bfloat16)   # MXU operands in bf16
    a_knn = a_knn.astype(jnp.bfloat16)   # masks stay f32 (VPU/EUP path)

    params = init_params(kp, col_dim, row_dim, inter_row_dim, embd_row_dim,
                         inter_col_dim, embd_col_dim, num_layers)
    packed = pack_params(params, embd_row_dim=embd_row_dim,
                         embd_col_dim=embd_col_dim)

    out_network, out_features = bigraph_forward(
        packed, x, a_ppi, m_ppi, a_knn, m_knn, ppi_edge_index,
        num_layers=num_layers,
        num_knn_edges=int(knn_edge_index.shape[1]),
        embd_row_dim=embd_row_dim, embd_col_dim=embd_col_dim)
    jax.block_until_ready((out_network, out_features))

    assert out_network.shape == (ppi_edge_index.shape[1],)
    assert out_features.shape == (row_dim, col_dim)
    assert jnp.all(jnp.isfinite(out_network)) and jnp.all(jnp.isfinite(out_features))
    print("KERNEL_OK")
</pallas_src>

<mosaic_0001>
module attributes {stable_mosaic.version = 11 : i64} {
  func.func @kernel(%arg0: memref<16x24xbf16, #tpu.memory_space<vmem>>, %arg1: memref<16x16xbf16, #tpu.memory_space<vmem>>, %arg2: memref<16x16xf32, #tpu.memory_space<vmem>>, %arg3: memref<24x24xbf16, #tpu.memory_space<vmem>>, %arg4: memref<24x24xf32, #tpu.memory_space<vmem>>, %arg5: memref<24x24xbf16, #tpu.memory_space<vmem>>, %arg6: memref<1x24xf32, #tpu.memory_space<vmem>>, %arg7: memref<2x16x16xbf16, #tpu.memory_space<vmem>>, %arg8: memref<2x16x1xf32, #tpu.memory_space<vmem>>, %arg9: memref<2x24x24xbf16, #tpu.memory_space<vmem>>, %arg10: memref<2x1x24xf32, #tpu.memory_space<vmem>>, %arg11: memref<24x32xbf16, #tpu.memory_space<vmem>>, %arg12: memref<1x32xf32, #tpu.memory_space<vmem>>, %arg13: memref<32x512xbf16, #tpu.memory_space<vmem>>, %arg14: memref<1x512xf32, #tpu.memory_space<vmem>>, %arg15: memref<16x32xbf16, #tpu.memory_space<vmem>>, %arg16: memref<1x32xf32, #tpu.memory_space<vmem>>, %arg17: memref<32x512xbf16, #tpu.memory_space<vmem>>, %arg18: memref<1x512xf32, #tpu.memory_space<vmem>>, %arg19: memref<128x32xbf16, #tpu.memory_space<vmem>>, %arg20: memref<1x32xf32, #tpu.memory_space<vmem>>, %arg21: memref<32x32xbf16, #tpu.memory_space<vmem>>, %arg22: memref<1x32xf32, #tpu.memory_space<vmem>>, %arg23: memref<32x128xbf16, #tpu.memory_space<vmem>>, %arg24: memref<1x128xf32, #tpu.memory_space<vmem>>, %arg25: memref<16x128xf32, #tpu.memory_space<vmem>>, %arg26: memref<24x128xf32, #tpu.memory_space<vmem>>) attributes {dimension_semantics = [], scalar_prefetch = 0 : i64, scratch_operands = 0 : i64, tpu.core_type = #tpu.core_type<tc>} {
    %c0 = arith.constant 0 : index
    %c0_0 = arith.constant 0 : index
    %0 = vector.load %arg1[%c0, %c0_0] : memref<16x16xbf16, #tpu.memory_space<vmem>>, vector<16x16xbf16>
    %c0_1 = arith.constant 0 : index
    %c0_2 = arith.constant 0 : index
    %1 = vector.load %arg2[%c0_1, %c0_2] : memref<16x16xf32, #tpu.memory_space<vmem>>, vector<16x16xf32>
    %c0_3 = arith.constant 0 : index
    %c0_4 = arith.constant 0 : index
    %2 = vector.load %arg3[%c0_3, %c0_4] : memref<24x24xbf16, #tpu.memory_space<vmem>>, vector<24x24xbf16>
    %c0_5 = arith.constant 0 : index
    %c0_6 = arith.constant 0 : index
    %3 = vector.load %arg4[%c0_5, %c0_6] : memref<24x24xf32, #tpu.memory_space<vmem>>, vector<24x24xf32>
    %c0_7 = arith.constant 0 : index
    %c0_8 = arith.constant 0 : index
    %4 = vector.load %arg0[%c0_7, %c0_8] : memref<16x24xbf16, #tpu.memory_space<vmem>>, vector<16x24xbf16>
    %c0_9 = arith.constant 0 : index
    %c0_10 = arith.constant 0 : index
    %5 = vector.load %arg5[%c0_9, %c0_10] : memref<24x24xbf16, #tpu.memory_space<vmem>>, vector<24x24xbf16>
    %cst = arith.constant dense<0.000000e+00> : vector<16x24xf32>
    %6 = tpu.matmul %4, %5, %cst {dimension_numbers = #tpu.dot_dimension_numbers<[1], [0], [0], [1], [0, 0, 1, 1], [], []>} : vector<16x24xbf16>, vector<24x24xbf16>, vector<16x24xf32> -> vector<16x24xf32>
    %c0_11 = arith.constant 0 : index
    %c0_12 = arith.constant 0 : index
    %7 = vector.load %arg6[%c0_11, %c0_12] : memref<1x24xf32, #tpu.memory_space<vmem>>, vector<1x24xf32>
    %8 = vector.broadcast %7 : vector<1x24xf32> to vector<16x24xf32>
    %9 = arith.addf %6, %8 : vector<16x24xf32>
    %c0_13 = arith.constant 0 : index
    %c0_14 = arith.constant 0 : index
    %c0_15 = arith.constant 0 : index
    %10 = vector.load %arg7[%c0_13, %c0_14, %c0_15] : memref<2x16x16xbf16, #tpu.memory_space<vmem>>, vector<1x16x16xbf16>
    %11 = vector.shape_cast %10 : vector<1x16x16xbf16> to vector<16x16xbf16>
    %c0_16 = arith.constant 0 : index
    %c0_17 = arith.constant 0 : index
    %c0_18 = arith.constant 0 : index
    %12 = vector.load %arg8[%c0_16, %c0_17, %c0_18] : memref<2x16x1xf32, #tpu.memory_space<vmem>>, vector<1x16x1xf32>
    %13 = vector.shape_cast %12 : vector<1x16x1xf32> to vector<16x1xf32>
    %c0_19 = arith.constant 0 : index
    %c0_20 = arith.constant 0 : index
    %c0_21 = arith.constant 0 : index
    %14 = vector.load %arg9[%c0_19, %c0_20, %c0_21] : memref<2x24x24xbf16, #tpu.memory_space<vmem>>, vector<1x24x24xbf16>
    %15 = vector.shape_cast %14 : vector<1x24x24xbf16> to vector<24x24xbf16>
    %c0_22 = arith.constant 0 : index
    %c0_23 = arith.constant 0 : index
    %c0_24 = arith.constant 0 : index
    %16 = vector.load %arg10[%c0_22, %c0_23, %c0_24] : memref<2x1x24xf32, #tpu.memory_space<vmem>>, vector<1x1x24xf32>
    %17 = vector.shape_cast %16 : vector<1x1x24xf32> to vector<1x24xf32>
    %18 = arith.truncf %9 : vector<16x24xf32> to vector<16x24xbf16>
    %cst_25 = arith.constant dense<0.000000e+00> : vector<16x24xf32>
    %19 = tpu.matmul %11, %18, %cst_25 {dimension_numbers = #tpu.dot_dimension_numbers<[0], [0], [1], [1], [0, 1, 1, 1], [], []>} : vector<16x16xbf16>, vector<16x24xbf16>, vector<16x24xf32> -> vector<16x24xf32>
    %20 = arith.truncf %19 : vector<16x24xf32> to vector<16x24xbf16>
    %cst_26 = arith.constant dense<0.000000e+00> : vector<16x24xf32>
    %21 = tpu.matmul %20, %2, %cst_26 {dimension_numbers = #tpu.dot_dimension_numbers<[1], [1], [0], [0], [0, 0, 1, 0], [], []>} : vector<16x24xbf16>, vector<24x24xbf16>, vector<16x24xf32> -> vector<16x24xf32>
    %22 = vector.broadcast %13 : vector<16x1xf32> to vector<16x24xf32>
    %23 = arith.addf %21, %22 : vector<16x24xf32>
    %cst_27 = arith.constant 0.000000e+00 : f32
    %24 = vector.broadcast %cst_27 : f32 to vector<16x24xf32>
    %25 = arith.cmpf oge, %23, %24 : vector<16x24xf32>
    %cst_28 = arith.constant 0.00999999977 : f32
    %26 = vector.broadcast %cst_28 : f32 to vector<16x24xf32>
    %27 = arith.mulf %26, %23 : vector<16x24xf32>
    %28 = arith.select %25, %23, %27 : vector<16x24xi1>, vector<16x24xf32>
    %29 = arith.truncf %28 : vector<16x24xf32> to vector<16x24xbf16>
    %cst_29 = arith.constant dense<0.000000e+00> : vector<16x24xf32>
    %30 = tpu.matmul %29, %15, %cst_29 {dimension_numbers = #tpu.dot_dimension_numbers<[1], [0], [0], [1], [0, 0, 1, 1], [], []>} : vector<16x24xbf16>, vector<24x24xbf16>, vector<16x24xf32> -> vector<16x24xf32>
    %31 = arith.truncf %30 : vector<16x24xf32> to vector<16x24xbf16>
    %cst_30 = arith.constant dense<0.000000e+00> : vector<16x24xf32>
    %32 = tpu.matmul %0, %31, %cst_30 {dimension_numbers = #tpu.dot_dimension_numbers<[1], [0], [0], [1], [0, 0, 1, 1], [], []>} : vector<16x16xbf16>, vector<16x24xbf16>, vector<16x24xf32> -> vector<16x24xf32>
    %33 = vector.broadcast %17 : vector<1x24xf32> to vector<16x24xf32>
    %34 = arith.addf %32, %33 : vector<16x24xf32>
    %cst_31 = arith.constant 0.000000e+00 : f32
    %35 = vector.broadcast %cst_31 : f32 to vector<16x24xf32>
    %36 = arith.cmpf oge, %34, %35 : vector<16x24xf32>
    %cst_32 = arith.constant 0.00999999977 : f32
    %37 = vector.broadcast %cst_32 : f32 to vector<16x24xf32>
    %38 = arith.mulf %37, %34 : vector<16x24xf32>
    %39 = arith.select %36, %34, %38 : vector<16x24xi1>, vector<16x24xf32>
    %c1 = arith.constant 1 : index
    %c0_33 = arith.constant 0 : index
    %c0_34 = arith.constant 0 : index
    %40 = vector.load %arg7[%c1, %c0_33, %c0_34] : memref<2x16x16xbf16, #tpu.memory_space<vmem>>, vector<1x16x16xbf16>
    %41 = vector.shape_cast %40 : vector<1x16x16xbf16> to vector<16x16xbf16>
    %c1_35 = arith.constant 1 : index
    %c0_36 = arith.constant 0 : index
    %c0_37 = arith.constant 0 : index
    %42 = vector.load %arg8[%c1_35, %c0_36, %c0_37] : memref<2x16x1xf32, #tpu.memory_space<vmem>>, vector<1x16x1xf32>
    %43 = vector.shape_cast %42 : vector<1x16x1xf32> to vector<16x1xf32>
    %c1_38 = arith.constant 1 : index
    %c0_39 = arith.constant 0 : index
    %c0_40 = arith.constant 0 : index
    %44 = vector.load %arg9[%c1_38, %c0_39, %c0_40] : memref<2x24x24xbf16, #tpu.memory_space<vmem>>, vector<1x24x24xbf16>
    %45 = vector.shape_cast %44 : vector<1x24x24xbf16> to vector<24x24xbf16>
    %c1_41 = arith.constant 1 : index
    %c0_42 = arith.constant 0 : index
    %c0_43 = arith.constant 0 : index
    %46 = vector.load %arg10[%c1_41, %c0_42, %c0_43] : memref<2x1x24xf32, #tpu.memory_space<vmem>>, vector<1x1x24xf32>
    %47 = vector.shape_cast %46 : vector<1x1x24xf32> to vector<1x24xf32>
    %48 = arith.truncf %39 : vector<16x24xf32> to vector<16x24xbf16>
    %cst_44 = arith.constant dense<0.000000e+00> : vector<16x24xf32>
    %49 = tpu.matmul %41, %48, %cst_44 {dimension_numbers = #tpu.dot_dimension_numbers<[0], [0], [1], [1], [0, 1, 1, 1], [], []>} : vector<16x16xbf16>, vector<16x24xbf16>, vector<16x24xf32> -> vector<16x24xf32>
    %50 = arith.truncf %49 : vector<16x24xf32> to vector<16x24xbf16>
    %cst_45 = arith.constant dense<0.000000e+00> : vector<16x24xf32>
    %51 = tpu.matmul %50, %2, %cst_45 {dimension_numbers = #tpu.dot_dimension_numbers<[1], [1], [0], [0], [0, 0, 1, 0], [], []>} : vector<16x24xbf16>, vector<24x24xbf16>, vector<16x24xf32> -> vector<16x24xf32>
    %52 = vector.broadcast %43 : vector<16x1xf32> to vector<16x24xf32>
    %53 = arith.addf %51, %52 : vector<16x24xf32>
    %cst_46 = arith.constant 0.000000e+00 : f32
    %54 = vector.broadcast %cst_46 : f32 to vector<16x24xf32>
    %55 = arith.cmpf oge, %53, %54 : vector<16x24xf32>
    %cst_47 = arith.constant 0.00999999977 : f32
    %56 = vector.broadcast %cst_47 : f32 to vector<16x24xf32>
    %57 = arith.mulf %56, %53 : vector<16x24xf32>
    %58 = arith.select %55, %53, %57 : vector<16x24xi1>, vector<16x24xf32>
    %59 = arith.truncf %58 : vector<16x24xf32> to vector<16x24xbf16>
    %cst_48 = arith.constant dense<0.000000e+00> : vector<16x24xf32>
    %60 = tpu.matmul %59, %45, %cst_48 {dimension_numbers = #tpu.dot_dimension_numbers<[1], [0], [0], [1], [0, 0, 1, 1], [], []>} : vector<16x24xbf16>, vector<24x24xbf16>, vector<16x24xf32> -> vector<16x24xf32>
    %61 = arith.truncf %60 : vector<16x24xf32> to vector<16x24xbf16>
    %cst_49 = arith.constant dense<0.000000e+00> : vector<16x24xf32>
    %62 = tpu.matmul %0, %61, %cst_49 {dimension_numbers = #tpu.dot_dimension_numbers<[1], [0], [0], [1], [0, 0, 1, 1], [], []>} : vector<16x16xbf16>, vector<16x24xbf16>, vector<16x24xf32> -> vector<16x24xf32>
    %63 = vector.broadcast %47 : vector<1x24xf32> to vector<16x24xf32>
    %64 = arith.addf %62, %63 : vector<16x24xf32>
    %cst_50 = arith.constant 0.000000e+00 : f32
    %65 = vector.broadcast %cst_50 : f32 to vector<16x24xf32>
    %66 = arith.cmpf oge, %64, %65 : vector<16x24xf32>
    %cst_51 = arith.constant 0.00999999977 : f32
    %67 = vector.broadcast %cst_51 : f32 to vector<16x24xf32>
    %68 = arith.mulf %67, %64 : vector<16x24xf32>
    %69 = arith.select %66, %64, %68 : vector<16x24xi1>, vector<16x24xf32>
    %c0_52 = arith.constant 0 : index
    %c0_53 = arith.constant 0 : index
    %70 = vector.load %arg11[%c0_52, %c0_53] : memref<24x32xbf16, #tpu.memory_space<vmem>>, vector<24x32xbf16>
    %71 = arith.truncf %69 : vector<16x24xf32> to vector<16x24xbf16>
    %cst_54 = arith.constant dense<0.000000e+00> : vector<16x32xf32>
    %72 = tpu.matmul %71, %70, %cst_54 {dimension_numbers = #tpu.dot_dimension_numbers<[1], [0], [0], [1], [0, 0, 1, 1], [], []>} : vector<16x24xbf16>, vector<24x32xbf16>, vector<16x32xf32> -> vector<16x32xf32>
    %73 = arith.truncf %72 : vector<16x32xf32> to vector<16x32xbf16>
    %cst_55 = arith.constant dense<0.000000e+00> : vector<16x32xf32>
    %74 = tpu.matmul %0, %73, %cst_55 {dimension_numbers = #tpu.dot_dimension_numbers<[1], [0], [0], [1], [0, 0, 1, 1], [], []>} : vector<16x16xbf16>, vector<16x32xbf16>, vector<16x32xf32> -> vector<16x32xf32>
    %c0_56 = arith.constant 0 : index
    %c0_57 = arith.constant 0 : index
    %75 = vector.load %arg12[%c0_56, %c0_57] : memref<1x32xf32, #tpu.memory_space<vmem>>, vector<1x32xf32>
    %76 = vector.broadcast %75 : vector<1x32xf32> to vector<16x32xf32>
    %77 = arith.addf %74, %76 : vector<16x32xf32>
    %cst_58 = arith.constant 0.000000e+00 : f32
    %78 = vector.broadcast %cst_58 : f32 to vector<16x32xf32>
    %79 = arith.cmpf oge, %77, %78 : vector<16x32xf32>
    %cst_59 = arith.constant 0.00999999977 : f32
    %80 = vector.broadcast %cst_59 : f32 to vector<16x32xf32>
    %81 = arith.mulf %80, %77 : vector<16x32xf32>
    %82 = arith.select %79, %77, %81 : vector<16x32xi1>, vector<16x32xf32>
    %c0_60 = arith.constant 0 : index
    %c0_61 = arith.constant 0 : index
    %83 = vector.load %arg13[%c0_60, %c0_61] : memref<32x512xbf16, #tpu.memory_space<vmem>>, vector<32x512xbf16>
    %84 = arith.truncf %82 : vector<16x32xf32> to vector<16x32xbf16>
    %cst_62 = arith.constant dense<0.000000e+00> : vector<16x512xf32>
    %85 = tpu.matmul %84, %83, %cst_62 {dimension_numbers = #tpu.dot_dimension_numbers<[1], [0], [0], [1], [0, 0, 1, 1], [], []>} : vector<16x32xbf16>, vector<32x512xbf16>, vector<16x512xf32> -> vector<16x512xf32>
    %c0_63 = arith.constant 0 : index
    %c0_64 = arith.constant 0 : index
    %86 = vector.load %arg14[%c0_63, %c0_64] : memref<1x512xf32, #tpu.memory_space<vmem>>, vector<1x512xf32>
    %87 = vector.broadcast %86 : vector<1x512xf32> to vector<16x512xf32>
    %88 = arith.addf %85, %87 : vector<16x512xf32>
    %89 = vector.extract_strided_slice %88 {offsets = [0, 0], sizes = [16, 128], strides = [1, 1]} : vector<16x512xf32> to vector<16x128xf32>
    %90 = vector.extract_strided_slice %88 {offsets = [0, 128], sizes = [16, 128], strides = [1, 1]} : vector<16x512xf32> to vector<16x128xf32>
    %91 = vector.extract_strided_slice %88 {offsets = [0, 256], sizes = [16, 128], strides = [1, 1]} : vector<16x512xf32> to vector<16x128xf32>
    %92 = vector.extract_strided_slice %88 {offsets = [0, 384], sizes = [16, 128], strides = [1, 1]} : vector<16x512xf32> to vector<16x128xf32>
    %93 = arith.truncf %89 : vector<16x128xf32> to vector<16x128xbf16>
    %94 = arith.truncf %90 : vector<16x128xf32> to vector<16x128xbf16>
    %cst_65 = arith.constant dense<0.000000e+00> : vector<16x16xf32>
    %95 = tpu.matmul %93, %94, %cst_65 {dimension_numbers = #tpu.dot_dimension_numbers<[1], [1], [0], [0], [0, 0, 1, 0], [], []>} : vector<16x128xbf16>, vector<16x128xbf16>, vector<16x16xf32> -> vector<16x16xf32>
    %cst_66 = arith.constant 0.353553385 : f32
    %96 = vector.broadcast %cst_66 : f32 to vector<16x16xf32>
    %97 = arith.mulf %95, %96 : vector<16x16xf32>
    %cst_67 = arith.constant 1.000000e+00 : f32
    %98 = vector.broadcast %cst_67 : f32 to vector<16x16xf32>
    %99 = arith.subf %1, %98 : vector<16x16xf32>
    %cst_68 = arith.constant 1.000000e+30 : f32
    %100 = vector.broadcast %cst_68 : f32 to vector<16x16xf32>
    %101 = arith.mulf %99, %100 : vector<16x16xf32>
    %102 = arith.addf %97, %101 : vector<16x16xf32>
    %cst_69 = arith.constant dense<0xFF800000> : vector<16xf32>
    %103 = vector.multi_reduction <maximumf>, %102, %cst_69 [1] : vector<16x16xf32> to vector<16xf32>
    %104 = vector.shape_cast %103 : vector<16xf32> to vector<16x1xf32>
    %105 = vector.broadcast %104 : vector<16x1xf32> to vector<16x16xf32>
    %106 = arith.subf %102, %105 : vector<16x16xf32>
    %107 = math.exp %106 : vector<16x16xf32>
    %108 = arith.mulf %107, %1 : vector<16x16xf32>
    %cst_70 = arith.constant dense<0.000000e+00> : vector<16xf32>
    %109 = vector.multi_reduction <add>, %108, %cst_70 [1] : vector<16x16xf32> to vector<16xf32>
    %110 = vector.shape_cast %109 : vector<16xf32> to vector<16x1xf32>
    %cst_71 = arith.constant 1.000000e-16 : f32
    %111 = vector.broadcast %cst_71 : f32 to vector<16x1xf32>
    %112 = arith.maximumf %110, %111 : vector<16x1xf32>
    %113 = tpu.reciprocal %112 {approx = true} : vector<16x1xf32> -> vector<16x1xf32>
    %114 = vector.broadcast %113 : vector<16x1xf32> to vector<16x16xf32>
    %115 = arith.mulf %108, %114 : vector<16x16xf32>
    %116 = arith.truncf %115 : vector<16x16xf32> to vector<16x16xbf16>
    %117 = arith.truncf %91 : vector<16x128xf32> to vector<16x128xbf16>
    %cst_72 = arith.constant dense<0.000000e+00> : vector<16x128xf32>
    %118 = tpu.matmul %116, %117, %cst_72 {dimension_numbers = #tpu.dot_dimension_numbers<[1], [0], [0], [1], [0, 0, 1, 1], [], []>} : vector<16x16xbf16>, vector<16x128xbf16>, vector<16x128xf32> -> vector<16x128xf32>
    %119 = arith.addf %118, %92 : vector<16x128xf32>
    %c0_73 = arith.constant 0 : index
    %c0_74 = arith.constant 0 : index
    %120 = vector.load %arg25[%c0_73, %c0_74] : memref<16x128xf32, #tpu.memory_space<vmem>>, vector<16x128xf32>
    tpu.vector_store %arg25[%c0_73, %c0_74], %119 {strides = array<i32>} : memref<16x128xf32, #tpu.memory_space<vmem>>, vector<16x128xf32>,
    %c0_75 = arith.constant 0 : index
    %c0_76 = arith.constant 0 : index
    %121 = vector.load %arg15[%c0_75, %c0_76] : memref<16x32xbf16, #tpu.memory_space<vmem>>, vector<16x32xbf16>
    %122 = arith.truncf %69 : vector<16x24xf32> to vector<16x24xbf16>
    %cst_77 = arith.constant dense<0.000000e+00> : vector<24x32xf32>
    %123 = tpu.matmul %122, %121, %cst_77 {dimension_numbers = #tpu.dot_dimension_numbers<[0], [0], [1], [1], [0, 1, 1, 1], [], []>} : vector<16x24xbf16>, vector<16x32xbf16>, vector<24x32xf32> -> vector<24x32xf32>
    %124 = arith.truncf %123 : vector<24x32xf32> to vector<24x32xbf16>
    %cst_78 = arith.constant dense<0.000000e+00> : vector<24x32xf32>
    %125 = tpu.matmul %2, %124, %cst_78 {dimension_numbers = #tpu.dot_dimension_numbers<[1], [0], [0], [1], [0, 0, 1, 1], [], []>} : vector<24x24xbf16>, vector<24x32xbf16>, vector<24x32xf32> -> vector<24x32xf32>
    %c0_79 = arith.constant 0 : index
    %c0_80 = arith.constant 0 : index
    %126 = vector.load %arg16[%c0_79, %c0_80] : memref<1x32xf32, #tpu.memory_space<vmem>>, vector<1x32xf32>
    %127 = vector.broadcast %126 : vector<1x32xf32> to vector<24x32xf32>
    %128 = arith.addf %125, %127 : vector<24x32xf32>
    %cst_81 = arith.constant 0.000000e+00 : f32
    %129 = vector.broadcast %cst_81 : f32 to vector<24x32xf32>
    %130 = arith.cmpf oge, %128, %129 : vector<24x32xf32>
    %cst_82 = arith.constant 0.00999999977 : f32
    %131 = vector.broadcast %cst_82 : f32 to vector<24x32xf32>
    %132 = arith.mulf %131, %128 : vector<24x32xf32>
    %133 = arith.select %130, %128, %132 : vector<24x32xi1>, vector<24x32xf32>
    %c0_83 = arith.constant 0 : index
    %c0_84 = arith.constant 0 : index
    %134 = vector.load %arg17[%c0_83, %c0_84] : memref<32x512xbf16, #tpu.memory_space<vmem>>, vector<32x512xbf16>
    %135 = arith.truncf %133 : vector<24x32xf32> to vector<24x32xbf16>
    %cst_85 = arith.constant dense<0.000000e+00> : vector<24x512xf32>
    %136 = tpu.matmul %135, %134, %cst_85 {dimension_numbers = #tpu.dot_dimension_numbers<[1], [0], [0], [1], [0, 0, 1, 1], [], []>} : vector<24x32xbf16>, vector<32x512xbf16>, vector<24x512xf32> -> vector<24x512xf32>
    %c0_86 = arith.constant 0 : index
    %c0_87 = arith.constant 0 : index
    %137 = vector.load %arg18[%c0_86, %c0_87] : memref<1x512xf32, #tpu.memory_space<vmem>>, vector<1x512xf32>
    %138 = vector.broadcast %137 : vector<1x512xf32> to vector<24x512xf32>
    %139 = arith.addf %136, %138 : vector<24x512xf32>
    %140 = vector.extract_strided_slice %139 {offsets = [0, 0], sizes = [24, 128], strides = [1, 1]} : vector<24x512xf32> to vector<24x128xf32>
    %141 = vector.extract_strided_slice %139 {offsets = [0, 128], sizes = [24, 128], strides = [1, 1]} : vector<24x512xf32> to vector<24x128xf32>
    %142 = vector.extract_strided_slice %139 {offsets = [0, 256], sizes = [24, 128], strides = [1, 1]} : vector<24x512xf32> to vector<24x128xf32>
    %143 = vector.extract_strided_slice %139 {offsets = [0, 384], sizes = [24, 128], strides = [1, 1]} : vector<24x512xf32> to vector<24x128xf32>
    %144 = arith.truncf %140 : vector<24x128xf32> to vector<24x128xbf16>
    %145 = arith.truncf %141 : vector<24x128xf32> to vector<24x128xbf16>
    %cst_88 = arith.constant dense<0.000000e+00> : vector<24x24xf32>
    %146 = tpu.matmul %144, %145, %cst_88 {dimension_numbers = #tpu.dot_dimension_numbers<[1], [1], [0], [0], [0, 0, 1, 0], [], []>} : vector<24x128xbf16>, vector<24x128xbf16>, vector<24x24xf32> -> vector<24x24xf32>
    %cst_89 = arith.constant 0.353553385 : f32
    %147 = vector.broadcast %cst_89 : f32 to vector<24x24xf32>
    %148 = arith.mulf %146, %147 : vector<24x24xf32>
    %149 = arith.mulf %148, %3 : vector<24x24xf32>
    %150 = vector.shape_cast %149 : vector<24x24xf32> to vector<1x24x24xf32>
    %cst_90 = arith.constant dense<0.000000e+00> : vector<1xf32>
    %151 = vector.multi_reduction <add>, %150, %cst_90 [1, 2] : vector<1x24x24xf32> to vector<1xf32>
    %152 = vector.shape_cast %151 : vector<1xf32> to vector<1x1x1xf32>
    %153 = vector.extract %152[0, 0, 0] : f32 from vector<1x1x1xf32>
    %cst_91 = arith.constant 0.020833334 : f32
    %154 = arith.mulf %153, %cst_91 : f32
    %155 = vector.broadcast %154 : f32 to vector<24x24xf32>
    %156 = arith.subf %148, %155 : vector<24x24xf32>
    %157 = arith.mulf %156, %156 : vector<24x24xf32>
    %158 = arith.mulf %3, %157 : vector<24x24xf32>
    %159 = vector.shape_cast %158 : vector<24x24xf32> to vector<1x24x24xf32>
    %cst_92 = arith.constant dense<0.000000e+00> : vector<1xf32>
    %160 = vector.multi_reduction <add>, %159, %cst_92 [1, 2] : vector<1x24x24xf32> to vector<1xf32>
    %161 = vector.shape_cast %160 : vector<1xf32> to vector<1x1x1xf32>
    %162 = vector.extract %161[0, 0, 0] : f32 from vector<1x1x1xf32>
    %cst_93 = arith.constant 0.0212765951 : f32
    %163 = arith.mulf %162, %cst_93 : f32
    %cst_94 = arith.constant 9.99999996E-13 : f32
    %164 = arith.maximumf %163, %cst_94 : f32
    %165 = math.rsqrt %164 : f32
    %cst_95 = arith.constant 1.500000e+00 : f32
    %166 = arith.mulf %cst_95, %165 : f32
    %167 = vector.broadcast %166 : f32 to vector<24x24xf32>
    %168 = arith.mulf %148, %167 : vector<24x24xf32>
    %cst_96 = arith.constant 0.000000e+00 : f32
    %169 = vector.broadcast %cst_96 : f32 to vector<24x24xf32>
    %170 = arith.subf %169, %168 : vector<24x24xf32>
    %171 = math.exp %170 : vector<24x24xf32>
    %cst_97 = arith.constant 1.000000e+00 : f32
    %172 = vector.broadcast %cst_97 : f32 to vector<24x24xf32>
    %173 = arith.addf %172, %171 : vector<24x24xf32>
    %174 = tpu.reciprocal %173 {approx = true} : vector<24x24xf32> -> vector<24x24xf32>
    %175 = arith.mulf %3, %174 : vector<24x24xf32>
    %176 = arith.truncf %175 : vector<24x24xf32> to vector<24x24xbf16>
    %177 = arith.truncf %142 : vector<24x128xf32> to vector<24x128xbf16>
    %cst_98 = arith.constant dense<0.000000e+00> : vector<24x128xf32>
    %178 = tpu.matmul %176, %177, %cst_98 {dimension_numbers = #tpu.dot_dimension_numbers<[1], [0], [0], [1], [0, 0, 1, 1], [], []>} : vector<24x24xbf16>, vector<24x128xbf16>, vector<24x128xf32> -> vector<24x128xf32>
    %179 = arith.addf %178, %143 : vector<24x128xf32>
    %c0_99 = arith.constant 0 : index
    %c0_100 = arith.constant 0 : index
    %180 = vector.load %arg19[%c0_99, %c0_100] : memref<128x32xbf16, #tpu.memory_space<vmem>>, vector<128x32xbf16>
    %181 = arith.truncf %179 : vector<24x128xf32> to vector<24x128xbf16>
    %cst_101 = arith.constant dense<0.000000e+00> : vector<24x32xf32>
    %182 = tpu.matmul %181, %180, %cst_101 {dimension_numbers = #tpu.dot_dimension_numbers<[1], [0], [0], [1], [0, 0, 1, 1], [], []>} : vector<24x128xbf16>, vector<128x32xbf16>, vector<24x32xf32> -> vector<24x32xf32>
    %c0_102 = arith.constant 0 : index
    %c0_103 = arith.constant 0 : index
    %183 = vector.load %arg20[%c0_102, %c0_103] : memref<1x32xf32, #tpu.memory_space<vmem>>, vector<1x32xf32>
    %184 = vector.broadcast %183 : vector<1x32xf32> to vector<24x32xf32>
    %185 = arith.addf %182, %184 : vector<24x32xf32>
    %cst_104 = arith.constant 0.000000e+00 : f32
    %186 = vector.broadcast %cst_104 : f32 to vector<24x32xf32>
    %187 = arith.maximumf %185, %186 : vector<24x32xf32>
    %c0_105 = arith.constant 0 : index
    %c0_106 = arith.constant 0 : index
    %188 = vector.load %arg21[%c0_105, %c0_106] : memref<32x32xbf16, #tpu.memory_space<vmem>>, vector<32x32xbf16>
    %189 = arith.truncf %187 : vector<24x32xf32> to vector<24x32xbf16>
    %cst_107 = arith.constant dense<0.000000e+00> : vector<24x32xf32>
    %190 = tpu.matmul %189, %188, %cst_107 {dimension_numbers = #tpu.dot_dimension_numbers<[1], [0], [0], [1], [0, 0, 1, 1], [], []>} : vector<24x32xbf16>, vector<32x32xbf16>, vector<24x32xf32> -> vector<24x32xf32>
    %c0_108 = arith.constant 0 : index
    %c0_109 = arith.constant 0 : index
    %191 = vector.load %arg22[%c0_108, %c0_109] : memref<1x32xf32, #tpu.memory_space<vmem>>, vector<1x32xf32>
    %192 = vector.broadcast %191 : vector<1x32xf32> to vector<24x32xf32>
    %193 = arith.addf %190, %192 : vector<24x32xf32>
    %cst_110 = arith.constant 0.000000e+00 : f32
    %194 = vector.broadcast %cst_110 : f32 to vector<24x32xf32>
    %195 = arith.maximumf %193, %194 : vector<24x32xf32>
    %c0_111 = arith.constant 0 : index
    %c0_112 = arith.constant 0 : index
    %196 = vector.load %arg23[%c0_111, %c0_112] : memref<32x128xbf16, #tpu.memory_space<vmem>>, vector<32x128xbf16>
    %197 = arith.truncf %195 : vector<24x32xf32> to vector<24x32xbf16>
    %cst_113 = arith.constant dense<0.000000e+00> : vector<24x128xf32>
    %198 = tpu.matmul %197, %196, %cst_113 {dimension_numbers = #tpu.dot_dimension_numbers<[1], [0], [0], [1], [0, 0, 1, 1], [], []>} : vector<24x32xbf16>, vector<32x128xbf16>, vector<24x128xf32> -> vector<24x128xf32>
    %c0_114 = arith.constant 0 : index
    %c0_115 = arith.constant 0 : index
    %199 = vector.load %arg24[%c0_114, %c0_115] : memref<1x128xf32, #tpu.memory_space<vmem>>, vector<1x128xf32>
    %200 = vector.broadcast %199 : vector<1x128xf32> to vector<24x128xf32>
    %201 = arith.addf %198, %200 : vector<24x128xf32>
    %cst_116 = arith.constant 0.000000e+00 : f32
    %202 = vector.broadcast %cst_116 : f32 to vector<24x128xf32>
    %203 = arith.maximumf %201, %202 : vector<24x128xf32>
    %c0_117 = arith.constant 0 : index
    %c0_118 = arith.constant 0 : index
    %204 = vector.load %arg26[%c0_117, %c0_118] : memref<24x128xf32, #tpu.memory_space<vmem>>, vector<24x128xf32>
    tpu.vector_store %arg26[%c0_117, %c0_118], %203 {strides = array<i32>} : memref<24x128xf32, #tpu.memory_space<vmem>>, vector<24x128xf32>,
    return
  }
}

</mosaic_0001>

<llo_original>
// kernel: bigraph_forward.1
$region0: #{bigraph_forward.1}
  #allocation0 [shape = 'u32[]', space=smem, size = 0x4, offset = 0x4, fixed_abs, tag = 'smem constant byte address 0x4 - core index']
  #allocation1 [shape = 'u32[144,128]{1,0:T(1,128)}', space=vmem, size = 0x12000, scoped, tag = 'internal scratch']
  %s0 = inlined_call_operand.vmem [shape: bf16[16,24], index: 0, kind: input, shape index: {}]
  %s1 = inlined_call_operand.vmem [shape: bf16[16,16], index: 1, kind: input, shape index: {}]
  %s2 = inlined_call_operand.vmem [shape: f32[16,16], index: 2, kind: input, shape index: {}]
  %s3 = inlined_call_operand.vmem [shape: bf16[24,24], index: 3, kind: input, shape index: {}]
  %s4 = inlined_call_operand.vmem [shape: f32[24,24], index: 4, kind: input, shape index: {}]
  %s5 = inlined_call_operand.hbm [shape: bf16[24,24], index: 5, kind: input, shape index: {}]
  %s6 = inlined_call_operand.hbm [shape: f32[1,24], index: 6, kind: input, shape index: {}]
  %s7 = inlined_call_operand.hbm [shape: bf16[2,16,16], index: 7, kind: input, shape index: {}]
  %s8 = inlined_call_operand.vmem [shape: f32[2,16,1], index: 8, kind: input, shape index: {}]
  %s9 = inlined_call_operand.vmem [shape: bf16[2,24,24], index: 9, kind: input, shape index: {}]
  %s10 = inlined_call_operand.hbm [shape: f32[2,1,24], index: 10, kind: input, shape index: {}]
  %s11 = inlined_call_operand.hbm [shape: bf16[24,32], index: 11, kind: input, shape index: {}]
  %s12 = inlined_call_operand.hbm [shape: f32[1,32], index: 12, kind: input, shape index: {}]
  %s13 = inlined_call_operand.vmem [shape: bf16[32,512], index: 13, kind: input, shape index: {}]
  %s14 = inlined_call_operand.hbm [shape: f32[1,512], index: 14, kind: input, shape index: {}]
  %s15 = inlined_call_operand.hbm [shape: bf16[16,32], index: 15, kind: input, shape index: {}]
  %s16 = inlined_call_operand.hbm [shape: f32[1,32], index: 16, kind: input, shape index: {}]
  %s17 = inlined_call_operand.vmem [shape: bf16[32,512], index: 17, kind: input, shape index: {}]
  %s18 = inlined_call_operand.hbm [shape: f32[1,512], index: 18, kind: input, shape index: {}]
  %s19 = inlined_call_operand.vmem [shape: bf16[128,32], index: 19, kind: input, shape index: {}]
  %s20 = inlined_call_operand.hbm [shape: f32[1,32], index: 20, kind: input, shape index: {}]
  %s21 = inlined_call_operand.hbm [shape: bf16[32,32], index: 21, kind: input, shape index: {}]
  %s22 = inlined_call_operand.hbm [shape: f32[1,32], index: 22, kind: input, shape index: {}]
  %s23 = inlined_call_operand.hbm [shape: bf16[32,128], index: 23, kind: input, shape index: {}]
  %s24 = inlined_call_operand.hbm [shape: f32[1,128], index: 24, kind: input, shape index: {}]
  %s25 = inlined_call_operand.vmem [shape: f32[16,128], index: 25, kind: output, shape index: {0}]
  %s26 = inlined_call_operand.vmem [shape: f32[24,128], index: 26, kind: output, shape index: {1}]
  %27 = xla_tuple %s25, %s26
  %s28 = sld [smem:[#allocation0]]
  $region178: #{bigraph_forward.1} parent=0
    _
  %s30 = ssub.s32 1, %s28
  %s31 = scalar_select 0, %s30, %s28
  $region1: #{bigraph_forward.1} parent=0
    #allocation2 [shape = 'u8[6144]{0}', space=vmem, size = 0x1800, scoped, tag = 'input window, operand 5, single buffered']
    #allocation3 [shape = 's32[1]{0}', space=sflag, size = 0x4, scoped, tag = 'scoped memory for bigraph_forward.1']
    #allocation4 [shape = 'u8[512]{0}', space=vmem, size = 0x400, scoped, tag = 'input window, operand 6, single buffered']
    #allocation5 [shape = 's32[1]{0}', space=sflag, size = 0x4, scoped, tag = 'scoped memory for bigraph_forward.1']
    #allocation6 [shape = 'u8[8192]{0}', space=vmem, size = 0x2000, scoped, tag = 'input window, operand 7, single buffered']
    #allocation7 [shape = 'u8[1024]{0}', space=vmem, size = 0x400, scoped, tag = 'input window, operand 10, single buffered']
    #allocation8 [shape = 's32[1]{0}', space=sflag, size = 0x4, scoped, tag = 'scoped memory for bigraph_forward.1']
    #allocation9 [shape = 'u8[6144]{0}', space=vmem, size = 0x1800, scoped, tag = 'input window, operand 11, single buffered']
    #allocation10 [shape = 'u8[512]{0}', space=vmem, size = 0x400, scoped, tag = 'input window, operand 12, single buffered']
    #allocation11 [shape = 's32[1]{0}', space=sflag, size = 0x4, scoped, tag = 'scoped memory for bigraph_forward.1']
    #allocation12 [shape = 'u8[2048]{0}', space=vmem, size = 0x800, scoped, tag = 'input window, operand 14, single buffered']
    #allocation13 [shape = 'u8[4096]{0}', space=vmem, size = 0x1000, scoped, tag = 'input window, operand 15, single buffered']
    #allocation14 [shape = 's32[1]{0}', space=sflag, size = 0x4, scoped, tag = 'scoped memory for bigraph_forward.1']
    #allocation15 [shape = 'u8[512]{0}', space=vmem, size = 0x400, scoped, tag = 'input window, operand 16, single buffered']
    #allocation16 [shape = 'u8[2048]{0}', space=vmem, size = 0x800, scoped, tag = 'input window, operand 18, single buffered']
    #allocation17 [shape = 's32[1]{0}', space=sflag, size = 0x4, scoped, tag = 'scoped memory for bigraph_forward.1']
    #allocation18 [shape = 'u8[512]{0}', space=vmem, size = 0x400, scoped, tag = 'input window, operand 20, single buffered']
    #allocation19 [shape = 'u8[8192]{0}', space=vmem, size = 0x2000, scoped, tag = 'input window, operand 21, single buffered']
    #allocation20 [shape = 's32[1]{0}', space=sflag, size = 0x4, scoped, tag = 'scoped memory for bigraph_forward.1']
    #allocation21 [shape = 'u8[512]{0}', space=vmem, size = 0x400, scoped, tag = 'input window, operand 22, single buffered']
    #allocation22 [shape = 'u8[8192]{0}', space=vmem, size = 0x2000, scoped, tag = 'input window, operand 23, single buffered']
    #allocation23 [shape = 's32[1]{0}', space=sflag, size = 0x4, scoped, tag = 'scoped memory for bigraph_forward.1']
    #allocation24 [shape = 'u8[512]{0}', space=vmem, size = 0x400, scoped, tag = 'input window, operand 24, single buffered']
    %32 = vsyncpa [#allocation3], 0
    %33 = vsyncpa [#allocation5], 0
    %34 = vsyncpa [#allocation8], 0
    %35 = vsyncpa [#allocation11], 0
    %36 = vsyncpa [#allocation14], 0
    %37 = vsyncpa [#allocation17], 0
    %38 = vsyncpa [#allocation20], 0
    %39 = vsyncpa [#allocation23], 0
    // Predicated region
    $region2: #{bigraph_forward.1} parent=1 // pred_check
      _
    $region3: #{bigraph_forward.1} parent=1 // pred_check_branch
      %41 = sbr.rel (0) target = $region5
    $region4: #{bigraph_forward.1} parent=1 // pred_region
      _
    $region5: #{bigraph_forward.1} parent=1 // pred_fallthru
      _
    // Predicated region
    $region6: #{bigraph_forward.1} parent=1 // pred_check
      _
    $region7: #{bigraph_forward.1} parent=1 // pred_check_branch
      %43 = sbr.rel (0) target = $region9
    $region8: #{bigraph_forward.1} parent=1 // pred_region
      _
    $region9: #{bigraph_forward.1} parent=1 // pred_fallthru
      _
    // Predicated region
    $region10: #{bigraph_forward.1} parent=1 // pred_check
      _
    $region11: #{bigraph_forward.1} parent=1 // pred_check_branch
      %45 = sbr.rel (0) target = $region13
    $region12: #{bigraph_forward.1} parent=1 // pred_region
      _
    $region13: #{bigraph_forward.1} parent=1 // pred_fallthru
      _
    // Predicated region
    $region14: #{bigraph_forward.1} parent=1 // pred_check
      _
    $region15: #{bigraph_forward.1} parent=1 // pred_check_branch
      %47 = sbr.rel (0) target = $region17
    $region16: #{bigraph_forward.1} parent=1 // pred_region
      _
    $region17: #{bigraph_forward.1} parent=1 // pred_fallthru
      _
    // Predicated region
    $region18: #{bigraph_forward.1} parent=1 // pred_check
      _
    $region19: #{bigraph_forward.1} parent=1 // pred_check_branch
      %49 = sbr.rel (0) target = $region21
    $region20: #{bigraph_forward.1} parent=1 // pred_region
      _
    $region21: #{bigraph_forward.1} parent=1 // pred_fallthru
      _
    // Predicated region
    $region22: #{bigraph_forward.1} parent=1 // pred_check
      _
    $region23: #{bigraph_forward.1} parent=1 // pred_check_branch
      %51 = sbr.rel (0) target = $region25
    $region24: #{bigraph_forward.1} parent=1 // pred_region
      %s53 = ssub.s32 192, 192
      %54 = vsyncadd [#allocation3], %s53
      %s55 = sshll.u32 [#allocation2], 4
      %s56 = int_to_ptr.vmem [resolvable:$true] %s55
      %61 = dma.hbm_to_vmem [thread:$0]  %s5, 192, %s56, [#allocation3], 64, 64, 4
    $region25: #{bigraph_forward.1} parent=1 // pred_fallthru
      _
    // Predicated region
    $region26: #{bigraph_forward.1} parent=1 // pred_check
      _
    $region27: #{bigraph_forward.1} parent=1 // pred_check_branch
      %63 = sbr.rel (0) target = $region29
    $region28: #{bigraph_forward.1} parent=1 // pred_region
      %s65 = ssub.s32 16, 16
      %66 = vsyncadd [#allocation5], %s65
      %s68 = sshll.u32 [#allocation4], 4
      %s69 = int_to_ptr.vmem [resolvable:$true] %s68
      %71 = dma.hbm_to_vmem [thread:$0]  %s6, 16, %s69, [#allocation5]
    $region29: #{bigraph_forward.1} parent=1 // pred_fallthru
      _
    // Predicated region
    $region30: #{bigraph_forward.1} parent=1 // pred_check
      _
    $region31: #{bigraph_forward.1} parent=1 // pred_check_branch
      %73 = sbr.rel (0) target = $region33
    $region32: #{bigraph_forward.1} parent=1 // pred_region
      %s75 = ssub.s32 256, 256
      %76 = vsyncadd [#allocation5], %s75
      %s77 = sshll.u32 [#allocation6], 4
      %s78 = int_to_ptr.vmem [resolvable:$true] %s77
      %83 = dma.hbm_to_vmem [thread:$0]  %s7, 256, %s78, [#allocation5], 64, 64, 4
    $region33: #{bigraph_forward.1} parent=1 // pred_fallthru
      _
    // Predicated region
    $region34: #{bigraph_forward.1} parent=1 // pred_check
      _
    $region35: #{bigraph_forward.1} parent=1 // pred_check_branch
      %85 = sbr.rel (0) target = $region37
    $region36: #{bigraph_forward.1} parent=1 // pred_region
      _
    $region37: #{bigraph_forward.1} parent=1 // pred_fallthru
      _
    // Predicated region
    $region38: #{bigraph_forward.1} parent=1 // pred_check
      _
    $region39: #{bigraph_forward.1} parent=1 // pred_check_branch
      %87 = sbr.rel (0) target = $region41
    $region40: #{bigraph_forward.1} parent=1 // pred_region
      _
    $region41: #{bigraph_forward.1} parent=1 // pred_fallthru
      _
    // Predicated region
    $region42: #{bigraph_forward.1} parent=1 // pred_check
      _
    $region43: #{bigraph_forward.1} parent=1 // pred_check_branch
      %89 = sbr.rel (0) target = $region45
    $region44: #{bigraph_forward.1} parent=1 // pred_region
      %s91 = ssub.s32 32, 32
      %92 = vsyncadd [#allocation8], %s91
      %s93 = sshll.u32 [#allocation7], 4
      %s94 = int_to_ptr.vmem [resolvable:$true] %s93
      %99 = dma.hbm_to_vmem [thread:$0]  %s10, 32, %s94, [#allocation8], 16, 16, 1
    $region45: #{bigraph_forward.1} parent=1 // pred_fallthru
      _
    // Predicated region
    $region46: #{bigraph_forward.1} parent=1 // pred_check
      _
    $region47: #{bigraph_forward.1} parent=1 // pred_check_branch
      %101 = sbr.rel (0) target = $region49
    $region48: #{bigraph_forward.1} parent=1 // pred_region
      %s103 = ssub.s32 192, 192
      %104 = vsyncadd [#allocation8], %s103
      %s105 = sshll.u32 [#allocation9], 4
      %s106 = int_to_ptr.vmem [resolvable:$true] %s105
      %111 = dma.hbm_to_vmem [thread:$0]  %s11, 192, %s106, [#allocation8], 64, 64, 4
    $region49: #{bigraph_forward.1} parent=1 // pred_fallthru
      _
    // Predicated region
    $region50: #{bigraph_forward.1} parent=1 // pred_check
      _
    $region51: #{bigraph_forward.1} parent=1 // pred_check_branch
      %113 = sbr.rel (0) target = $region53
    $region52: #{bigraph_forward.1} parent=1 // pred_region
      %s115 = ssub.s32 16, 16
      %116 = vsyncadd [#allocation11], %s115
      %s118 = sshll.u32 [#allocation10], 4
      %s119 = int_to_ptr.vmem [resolvable:$true] %s118
      %121 = dma.hbm_to_vmem [thread:$0]  %s12, 16, %s119, [#allocation11]
    $region53: #{bigraph_forward.1} parent=1 // pred_fallthru
      _
    // Predicated region
    $region54: #{bigraph_forward.1} parent=1 // pred_check
      _
    $region55: #{bigraph_forward.1} parent=1 // pred_check_branch
      %123 = sbr.rel (0) target = $region57
    $region56: #{bigraph_forward.1} parent=1 // pred_region
      _
    $region57: #{bigraph_forward.1} parent=1 // pred_fallthru
      _
    // Predicated region
    $region58: #{bigraph_forward.1} parent=1 // pred_check
      _
    $region59: #{bigraph_forward.1} parent=1 // pred_check_branch
      %125 = sbr.rel (0) target = $region61
    $region60: #{bigraph_forward.1} parent=1 // pred_region
      %s127 = ssub.s32 64, 64
      %128 = vsyncadd [#allocation11], %s127
      %s130 = sshll.u32 [#allocation12], 4
      %s131 = int_to_ptr.vmem [resolvable:$true] %s130
      %133 = dma.hbm_to_vmem [thread:$0]  %s14, 64, %s131, [#allocation11]
    $region61: #{bigraph_forward.1} parent=1 // pred_fallthru
      _
    // Predicated region
    $region62: #{bigraph_forward.1} parent=1 // pred_check
      _
    $region63: #{bigraph_forward.1} parent=1 // pred_check_branch
      %135 = sbr.rel (0) target = $region65
    $region64: #{bigraph_forward.1} parent=1 // pred_region
      %s137 = ssub.s32 128, 128
      %138 = vsyncadd [#allocation14], %s137
      %s139 = sshll.u32 [#allocation13], 4
      %s140 = int_to_ptr.vmem [resolvable:$true] %s139
      %145 = dma.hbm_to_vmem [thread:$0]  %s15, 128, %s140, [#allocation14], 64, 64, 4
    $region65: #{bigraph_forward.1} parent=1 // pred_fallthru
      _
    // Predicated region
    $region66: #{bigraph_forward.1} parent=1 // pred_check
      _
    $region67: #{bigraph_forward.1} parent=1 // pred_check_branch
      %147 = sbr.rel (0) target = $region69
    $region68: #{bigraph_forward.1} parent=1 // pred_region
      %s149 = ssub.s32 16, 16
      %150 = vsyncadd [#allocation14], %s149
      %s152 = sshll.u32 [#allocation15], 4
      %s153 = int_to_ptr.vmem [resolvable:$true] %s152
      %155 = dma.hbm_to_vmem [thread:$0]  %s16, 16, %s153, [#allocation14]
    $region69: #{bigraph_forward.1} parent=1 // pred_fallthru
      _
    // Predicated region
    $region70: #{bigraph_forward.1} parent=1 // pred_check
      _
    $region71: #{bigraph_forward.1} parent=1 // pred_check_branch
      %157 = sbr.rel (0) target = $region73
    $region72: #{bigraph_forward.1} parent=1 // pred_region
      _
    $region73: #{bigraph_forward.1} parent=1 // pred_fallthru
      _
    // Predicated region
    $region74: #{bigraph_forward.1} parent=1 // pred_check
      _
    $region75: #{bigraph_forward.1} parent=1 // pred_check_branch
      %159 = sbr.rel (0) target = $region77
    $region76: #{bigraph_forward.1} parent=1 // pred_region
      %s161 = ssub.s32 64, 64
      %162 = vsyncadd [#allocation17], %s161
      %s164 = sshll.u32 [#allocation16], 4
      %s165 = int_to_ptr.vmem [resolvable:$true] %s164
      %167 = dma.hbm_to_vmem [thread:$0]  %s18, 64, %s165, [#allocation17]
    $region77: #{bigraph_forward.1} parent=1 // pred_fallthru
      _
    // Predicated region
    $region78: #{bigraph_forward.1} parent=1 // pred_check
      _
    $region79: #{bigraph_forward.1} parent=1 // pred_check_branch
      %169 = sbr.rel (0) target = $region81
    $region80: #{bigraph_forward.1} parent=1 // pred_region
      _
    $region81: #{bigraph_forward.1} parent=1 // pred_fallthru
      _
    // Predicated region
    $region82: #{bigraph_forward.1} parent=1 // pred_check
      _
    $region83: #{bigraph_forward.1} parent=1 // pred_check_branch
      %171 = sbr.rel (0) target = $region85
    $region84: #{bigraph_forward.1} parent=1 // pred_region
      %s173 = ssub.s32 16, 16
      %174 = vsyncadd [#allocation17], %s173
      %s176 = sshll.u32 [#allocation18], 4
      %s177 = int_to_ptr.vmem [resolvable:$true] %s176
      %179 = dma.hbm_to_vmem [thread:$0]  %s20, 16, %s177, [#allocation17]
    $region85: #{bigraph_forward.1} parent=1 // pred_fallthru
      _
    // Predicated region
    $region86: #{bigraph_forward.1} parent=1 // pred_check
      _
    $region87: #{bigraph_forward.1} parent=1 // pred_check_branch
      %181 = sbr.rel (0) target = $region89
    $region88: #{bigraph_forward.1} parent=1 // pred_region
      %s183 = ssub.s32 256, 256
      %184 = vsyncadd [#allocation20], %s183
      %s185 = sshll.u32 [#allocation19], 4
      %s186 = int_to_ptr.vmem [resolvable:$true] %s185
      %191 = dma.hbm_to_vmem [thread:$0]  %s21, 256, %s186, [#allocation20], 64, 64, 4
    $region89: #{bigraph_forward.1} parent=1 // pred_fallthru
      _
    // Predicated region
    $region90: #{bigraph_forward.1} parent=1 // pred_check
      _
    $region91: #{bigraph_forward.1} parent=1 // pred_check_branch
      %193 = sbr.rel (0) target = $region93
    $region92: #{bigraph_forward.1} parent=1 // pred_region
      %s195 = ssub.s32 16, 16
      %196 = vsyncadd [#allocation20], %s195
      %s198 = sshll.u32 [#allocation21], 4
      %s199 = int_to_ptr.vmem [resolvable:$true] %s198
      %201 = dma.hbm_to_vmem [thread:$0]  %s22, 16, %s199, [#allocation20]
    $region93: #{bigraph_forward.1} parent=1 // pred_fallthru
      _
    // Predicated region
    $region94: #{bigraph_forward.1} parent=1 // pred_check
      _
    $region95: #{bigraph_forward.1} parent=1 // pred_check_branch
      %203 = sbr.rel (0) target = $region97
    $region96: #{bigraph_forward.1} parent=1 // pred_region
      %s205 = ssub.s32 256, 256
      %206 = vsyncadd [#allocation23], %s205
      %s207 = sshll.u32 [#allocation22], 4
      %s208 = int_to_ptr.vmem [resolvable:$true] %s207
      %213 = dma.hbm_to_vmem [thread:$0]  %s23, 256, %s208, [#allocation23], 64, 64, 4
    $region97: #{bigraph_forward.1} parent=1 // pred_fallthru
      _
    // Predicated region
    $region98: #{bigraph_forward.1} parent=1 // pred_check
      _
    $region99: #{bigraph_forward.1} parent=1 // pred_check_branch
      %215 = sbr.rel (0) target = $region101
    $region100: #{bigraph_forward.1} parent=1 // pred_region
      %s217 = ssub.s32 16, 16
      %218 = vsyncadd [#allocation23], %s217
      %s220 = sshll.u32 [#allocation24], 4
      %s221 = int_to_ptr.vmem [resolvable:$true] %s220
      %223 = dma.hbm_to_vmem [thread:$0]  %s24, 16, %s221, [#allocation23]
    $region101: #{bigraph_forward.1} parent=1 // pred_fallthru
      _
    // Predicated region
    $region102: #{bigraph_forward.1} parent=1 // pred_check
      _
    $region103: #{bigraph_forward.1} parent=1 // pred_check_branch
      %225 = sbr.rel (0) target = $region105
    $region104: #{bigraph_forward.1} parent=1 // pred_region
      %226 = dma.done [#allocation3], 192
    $region105: #{bigraph_forward.1} parent=1 // pred_fallthru
      _
    // Predicated region
    $region106: #{bigraph_forward.1} parent=1 // pred_check
      _
    $region107: #{bigraph_forward.1} parent=1 // pred_check_branch
      %228 = sbr.rel (0) target = $region109
    $region108: #{bigraph_forward.1} parent=1 // pred_region
      %229 = dma.done [#allocation5], 16
    $region109: #{bigraph_forward.1} parent=1 // pred_fallthru
      _
    // Predicated region
    $region110: #{bigraph_forward.1} parent=1 // pred_check
      _
    $region111: #{bigraph_forward.1} parent=1 // pred_check_branch
      %231 = sbr.rel (0) target = $region113
    $region112: #{bigraph_forward.1} parent=1 // pred_region
      %232 = dma.done [#allocation5], 256
    $region113: #{bigraph_forward.1} parent=1 // pred_fallthru
      _
    // Predicated region
    $region114: #{bigraph_forward.1} parent=1 // pred_check
      _
    $region115: #{bigraph_forward.1} parent=1 // pred_check_branch
      %234 = sbr.rel (0) target = $region117
    $region116: #{bigraph_forward.1} parent=1 // pred_region
      %235 = dma.done [#allocation8], 32
    $region117: #{bigraph_forward.1} parent=1 // pred_fallthru
      _
    // Predicated region
    $region118: #{bigraph_forward.1} parent=1 // pred_check
      _
    $region119: #{bigraph_forward.1} parent=1 // pred_check_branch
      %237 = sbr.rel (0) target = $region121
    $region120: #{bigraph_forward.1} parent=1 // pred_region
      %238 = dma.done [#allocation8], 192
    $region121: #{bigraph_forward.1} parent=1 // pred_fallthru
      _
    // Predicated region
    $region122: #{bigraph_forward.1} parent=1 // pred_check
      _
    $region123: #{bigraph_forward.1} parent=1 // pred_check_branch
      %240 = sbr.rel (0) target = $region125
    $region124: #{bigraph_forward.1} parent=1 // pred_region
      %241 = dma.done [#allocation11], 16
    $region125: #{bigraph_forward.1} parent=1 // pred_fallthru
      _
    // Predicated region
    $region126: #{bigraph_forward.1} parent=1 // pred_check
      _
    $region127: #{bigraph_forward.1} parent=1 // pred_check_branch
      %243 = sbr.rel (0) target = $region129
    $region128: #{bigraph_forward.1} parent=1 // pred_region
      %244 = dma.done [#allocation11], 64
    $region129: #{bigraph_forward.1} parent=1 // pred_fallthru
      _
    // Predicated region
    $region130: #{bigraph_forward.1} parent=1 // pred_check
      _
    $region131: #{bigraph_forward.1} parent=1 // pred_check_branch
      %246 = sbr.rel (0) target = $region133
    $region132: #{bigraph_forward.1} parent=1 // pred_region
      %247 = dma.done [#allocation14], 128
    $region133: #{bigraph_forward.1} parent=1 // pred_fallthru
      _
    // Predicated region
    $region134: #{bigraph_forward.1} parent=1 // pred_check
      _
    $region135: #{bigraph_forward.1} parent=1 // pred_check_branch
      %249 = sbr.rel (0) target = $region137
    $region136: #{bigraph_forward.1} parent=1 // pred_region
      %250 = dma.done [#allocation14], 16
    $region137: #{bigraph_forward.1} parent=1 // pred_fallthru
      _
    // Predicated region
    $region138: #{bigraph_forward.1} parent=1 // pred_check
      _
    $region139: #{bigraph_forward.1} parent=1 // pred_check_branch
      %252 = sbr.rel (0) target = $region141
    $region140: #{bigraph_forward.1} parent=1 // pred_region
      %253 = dma.done [#allocation17], 64
    $region141: #{bigraph_forward.1} parent=1 // pred_fallthru
      _
    // Predicated region
    $region142: #{bigraph_forward.1} parent=1 // pred_check
      _
    $region143: #{bigraph_forward.1} parent=1 // pred_check_branch
      %255 = sbr.rel (0) target = $region145
    $region144: #{bigraph_forward.1} parent=1 // pred_region
      %256 = dma.done [#allocation17], 16
    $region145: #{bigraph_forward.1} parent=1 // pred_fallthru
      _
    // Predicated region
    $region146: #{bigraph_forward.1} parent=1 // pred_check
      _
    $region147: #{bigraph_forward.1} parent=1 // pred_check_branch
      %258 = sbr.rel (0) target = $region149
    $region148: #{bigraph_forward.1} parent=1 // pred_region
      %259 = dma.done [#allocation20], 256
    $region149: #{bigraph_forward.1} parent=1 // pred_fallthru
      _
    // Predicated region
    $region150: #{bigraph_forward.1} parent=1 // pred_check
      _
    $region151: #{bigraph_forward.1} parent=1 // pred_check_branch
      %261 = sbr.rel (0) target = $region153
    $region152: #{bigraph_forward.1} parent=1 // pred_region
      %262 = dma.done [#allocation20], 16
    $region153: #{bigraph_forward.1} parent=1 // pred_fallthru
      _
    // Predicated region
    $region154: #{bigraph_forward.1} parent=1 // pred_check
      _
    $region155: #{bigraph_forward.1} parent=1 // pred_check_branch
      %264 = sbr.rel (0) target = $region157
    $region156: #{bigraph_forward.1} parent=1 // pred_region
      %265 = dma.done [#allocation23], 256
    $region157: #{bigraph_forward.1} parent=1 // pred_fallthru
      _
    // Predicated region
    $region158: #{bigraph_forward.1} parent=1 // pred_check
      _
    $region159: #{bigraph_forward.1} parent=1 // pred_check_branch
      %267 = sbr.rel (0) target = $region161
    $region160: #{bigraph_forward.1} parent=1 // pred_region
      %268 = dma.done [#allocation23], 16
    $region161: #{bigraph_forward.1} parent=1 // pred_fallthru
      _
    %v270 = vld [vmem:[%s1] sm:$0xf]
    %v271 = vld [vmem:[%s1 + $0x4] sm:$0xf]
    %v272 = vld [vmem:[%s2] sm:$0xff]
    %v273 = vld [vmem:[%s2 + $0x8] sm:$0xff]
    %v274 = vld [vmem:[%s3] sm:$0xf]
    %v275 = vld [vmem:[%s3 + $0x4] sm:$0xf]
    %v276 = vld [vmem:[%s3 + $0x8] sm:$0xf]
    %v277 = vld [vmem:[%s4] sm:$0xff]
    %v278 = vld [vmem:[%s4 + $0x8] sm:$0xff]
    %v279 = vld [vmem:[%s4 + $0x10] sm:$0xff]
    %v280 = vld [vmem:[%s0] sm:$0xf]
    %v281 = vld [vmem:[%s0 + $0x4] sm:$0xf]
    %v282 = vld [vmem:[#allocation2] sm:$0xf]
    %v283 = vld [vmem:[#allocation2 + $0x4] sm:$0xf]
    %v284 = vld [vmem:[#allocation2 + $0x8] sm:$0xf]
    %v285 = vld [vmem:[#allocation4] sm:$0x1]
    %v287 = vlaneseq
    %v288 = vshrl.u32 %v287, 7
    %v289 = vsub.s32 0, %v288
    %v290 = vrot.slane %v285, %v289
    %v294 = vunpack.c.l.b16 %v280
    %v295 = vunpack.c.l.b16 %v281
    %v296 = vpack.c.b16 %v295, %v294
    %v300 = vunpack.c.l.b16 %v282
    %v301 = vunpack.c.l.b16 %v283
    %v302 = vunpack.c.l.b16 %v284
    %v303 = vpack.c.b16 %v301, %v300
    %v304 = vpack.c.b16 %v302, %v302
    %vm306 = vcmask 195584
    %v308 = vsel %vm306, %v296, 0
    %vm310 = vcmask 1043456
    %v312 = vsel %vm310, %v304, 0
    %314 = vmatprep.subr.bf16.mxu0 0
    %315 = vmatpush1.bf16.msra.mxu0 %v303
    %316 = vmatprep.subr.bf16.mxu0 0
    %317 = vmatpush1.bf16.msra.mxu0 %v312
    %318 = vmatprep.subr.bf16.mxu0 0
    %319 = vmatpush1.bf16.msra.mxu0 0
    %320 = vmatprep.subr.bf16.mxu0 0
    %321 = vmatpush1.bf16.msra.mxu0 0
    %322 = vmatprep.subr.bf16.mxu0 0
    %323 = vmatpush1.bf16.msra.mxu0 0
    %324 = vmatprep.subr.bf16.mxu0 0
    %325 = vmatpush1.bf16.msra.mxu0 0
    %326 = vmatprep.subr.bf16.mxu0 0
    %327 = vmatpush1.bf16.msra.mxu0 0
    %328 = vmatprep.subr.bf16.mxu0 0
    %329 = vmatpush1.bf16.msra.mxu0 0
    %330 = vmatprep.subr.bf16.mxu0 0
    %331 = vmatpush1.bf16.msra.mxu0 0
    %332 = vmatprep.subr.bf16.mxu0 0
    %333 = vmatpush1.bf16.msra.mxu0 0
    %334 = vmatprep.subr.bf16.mxu0 0
    %335 = vmatpush1.bf16.msra.mxu0 0
    %336 = vmatprep.subr.bf16.mxu0 0
    %337 = vmatpush1.bf16.msra.mxu0 0
    %338 = vmatprep.subr.bf16.mxu0 0
    %339 = vmatpush1.bf16.msra.mxu0 0
    %340 = vmatprep.subr.bf16.mxu0 0
    %341 = vmatpush1.bf16.msra.mxu0 0
    %342 = vmatprep.subr.bf16.mxu0 0
    %343 = vmatpush1.bf16.msra.mxu0 0
    %344 = vmatprep.subr.bf16.mxu0 0
    %345 = vmatpush1.bf16.msra.mxu0 0
    %346 = vmatprep.mubr.bf16.mxu0 0
    %347 = vmatmul.mubr.bf16.gmra.mrb[0].mxu0 %v308
    %v348 = vpop.f32.mrb[0].mxu0
    %v349 = vadd.f32 %v290, %v348
    %v350 = vpop.f32.mrb[0].mxu0
    %v351 = vpop.f32.mrb[0].mxu0
    %v352 = vadd.f32 %v290, %v351
    %v353 = vpop.f32.mrb[0].mxu0
    %354 = vdwg.mxu0
    %v355 = vld [vmem:[#allocation6] sm:$0xf]
    %v356 = vld [vmem:[#allocation6 + $0x4] sm:$0xf]
    %v357 = vld [vmem:[%s8] sm:$0xff]
    %v358 = vld [vmem:[%s8 + $0x8] sm:$0xff]
    %v359 = vld [vmem:[%s9] sm:$0xf]
    %v360 = vld [vmem:[%s9 + $0x4] sm:$0xf]
    %v361 = vld [vmem:[%s9 + $0x8] sm:$0xf]
    %v362 = vld [vmem:[#allocation7] sm:$0x1]
    %v363 = vpack.c.bf16 %v352, %v349
    %v366 = vunpack.c.l.b16 %v355
    %v367 = vunpack.c.l.b16 %v356
    %v368 = vpack.c.b16 %v367, %v366
    %370 = vxpose.xlu0.c.b16.start [1/8] %v368, 128
    %371 = vxpose.xlu0.c.b16.cont [2/8] 0, 128
    %372 = vxpose.xlu0.c.b16.cont [3/8] 0, 128
    %373 = vxpose.xlu0.c.b16.cont [4/8] 0, 128
    %374 = vxpose.xlu0.c.b16.cont [5/8] 0, 128
    %375 = vxpose.xlu0.c.b16.cont [6/8] 0, 128
    %376 = vxpose.xlu0.c.b16.cont [7/8] 0, 128
    %377 = vxpose.xlu0.c.b16.end [8/8] 0, 128
    %v378 = vpop.trf.xlu0
    %v379 = vpop.trf.xlu0
    %v380 = vpop.trf.xlu0
    %v381 = vpop.trf.xlu0
    %v382 = vpop.trf.xlu0
    %v383 = vpop.trf.xlu0
    %v384 = vpop.trf.xlu0
    %v385 = vpop.trf.xlu0
    %vm386 = vcmask 130048
    %v388 = vsel %vm386, %v378, 0
    %390 = vmatprep.subr.bf16.mxu0 0
    %391 = vmatpush1.bf16.msra.mxu0 %v363
    %392 = vmatprep.subr.bf16.mxu0 0
    %393 = vmatpush1.bf16.msra.mxu0 0
    %394 = vmatprep.subr.bf16.mxu0 0
    %395 = vmatpush1.bf16.msra.mxu0 0
    %396 = vmatprep.subr.bf16.mxu0 0
    %397 = vmatpush1.bf16.msra.mxu0 0
    %398 = vmatprep.subr.bf16.mxu0 0
    %399 = vmatpush1.bf16.msra.mxu0 0
    %400 = vmatprep.subr.bf16.mxu0 0
    %401 = vmatpush1.bf16.msra.mxu0 0
    %402 = vmatprep.subr.bf16.mxu0 0
    %403 = vmatpush1.bf16.msra.mxu0 0
    %404 = vmatprep.subr.bf16.mxu0 0
    %405 = vmatpush1.bf16.msra.mxu0 0
    %406 = vmatprep.subr.bf16.mxu0 0
    %407 = vmatpush1.bf16.msra.mxu0 0
    %408 = vmatprep.subr.bf16.mxu0 0
    %409 = vmatpush1.bf16.msra.mxu0 0
    %410 = vmatprep.subr.bf16.mxu0 0
    %411 = vmatpush1.bf16.msra.mxu0 0
    %412 = vmatprep.subr.bf16.mxu0 0
    %413 = vmatpush1.bf16.msra.mxu0 0
    %414 = vmatprep.subr.bf16.mxu0 0
    %415 = vmatpush1.bf16.msra.mxu0 0
    %416 = vmatprep.subr.bf16.mxu0 0
    %417 = vmatpush1.bf16.msra.mxu0 0
    %418 = vmatprep.subr.bf16.mxu0 0
    %419 = vmatpush1.bf16.msra.mxu0 0
    %420 = vmatprep.subr.bf16.mxu0 0
    %421 = vmatpush1.bf16.msra.mxu0 0
    %422 = vmatprep.mubr.bf16.mxu0 0
    %423 = vmatmul.mubr.bf16.gmra.mrb[0].mxu0 %v388
    %v424 = vpop.f32.mrb[0].mxu0
    %v425 = vadd.f32 0.0, %v424
    %v426 = vpop.f32.mrb[0].mxu0
    %v427 = vpop.f32.mrb[0].mxu0
    %v428 = vadd.f32 0.0, %v427
    %v429 = vpop.f32.mrb[0].mxu0
    %430 = vdwg.mxu0
    %v431 = vpack.c.bf16 %v428, %v425
    %433 = vset.pattern.permute.xlu0 0
    %434 = vperm.xlu0 %433, %v357
    %v435 = vpop.permute.xlu0 %434
    %438 = vset.pattern.permute.xlu0 0
    %439 = vperm.xlu0 %438, %v358
    %v440 = vpop.permute.xlu0 %439
    %v445 = vunpack.c.l.b16 %v274
    %v446 = vunpack.c.l.b16 %v275
    %v447 = vunpack.c.l.b16 %v276
    %v448 = vpack.c.b16 %v446, %v445
    %v449 = vpack.c.b16 %v447, %v447
    %v451 = vsel %vm306, %v431, 0
    %v454 = vsel %vm306, %v448, 0
    %v457 = vsel %vm306, %v449, 0
    %459 = vmatprep.subr.bf16.mxu0 0
    %460 = vmatpush1.bf16.xpose.msra.mxu0 %v454
    %461 = vmatprep.subr.bf16.mxu0 0
    %462 = vmatpush1.bf16.xpose.msra.mxu0 %v457
    %463 = vmatprep.subr.bf16.mxu0 0
    %464 = vmatpush1.bf16.xpose.msra.mxu0 0
    %465 = vmatprep.subr.bf16.mxu0 0
    %466 = vmatpush1.bf16.xpose.msra.mxu0 0
    %467 = vmatprep.subr.bf16.mxu0 0
    %468 = vmatpush1.bf16.xpose.msra.mxu0 0
    %469 = vmatprep.subr.bf16.mxu0 0
    %470 = vmatpush1.bf16.xpose.msra.mxu0 0
    %471 = vmatprep.subr.bf16.mxu0 0
    %472 = vmatpush1.bf16.xpose.msra.mxu0 0
    %473 = vmatprep.subr.bf16.mxu0 0
    %474 = vmatpush1.bf16.xpose.msra.mxu0 0
    %475 = vmatprep.subr.bf16.mxu0 0
    %476 = vmatpush1.bf16.xpose.msra.mxu0 0
    %477 = vmatprep.subr.bf16.mxu0 0
    %478 = vmatpush1.bf16.xpose.msra.mxu0 0
    %479 = vmatprep.subr.bf16.mxu0 0
    %480 = vmatpush1.bf16.xpose.msra.mxu0 0
    %481 = vmatprep.subr.bf16.mxu0 0
    %482 = vmatpush1.bf16.xpose.msra.mxu0 0
    %483 = vmatprep.subr.bf16.mxu0 0
    %484 = vmatpush1.bf16.xpose.msra.mxu0 0
    %485 = vmatprep.subr.bf16.mxu0 0
    %486 = vmatpush1.bf16.xpose.msra.mxu0 0
    %487 = vmatprep.subr.bf16.mxu0 0
    %488 = vmatpush1.bf16.xpose.msra.mxu0 0
    %489 = vmatprep.subr.bf16.mxu0 0
    %490 = vmatpush1.bf16.xpose.msra.mxu0 0
    %491 = vmatprep.mubr.bf16.mxu0 0
    %492 = vmatmul.mubr.bf16.gmra.mrb[0].mxu0 %v451
    %v493 = vpop.f32.mrb[0].mxu0
    %v494 = vadd.f32 %v435, %v493
    %v495 = vpop.f32.mrb[0].mxu0
    %v496 = vpop.f32.mrb[0].mxu0
    %v497 = vadd.f32 %v440, %v496
    %v498 = vpop.f32.mrb[0].mxu0
    %499 = vdwg.mxu0
    %vm500 = vcmp.ge.f32.partialorder %v494, 0.0
    %vm501 = vcmp.ge.f32.partialorder %v497, 0.0
    %v502 = vmul.f32 %v494, 0.01
    %v503 = vmul.f32 %v497, 0.01
    %v504 = vsel %vm500, %v494, %v502
    %v505 = vsel %vm501, %v497, %v503
    %v506 = vpack.c.bf16 %v505, %v504
    %v510 = vunpack.c.l.b16 %v359
    %v511 = vunpack.c.l.b16 %v360
    %v512 = vunpack.c.l.b16 %v361
    %v513 = vpack.c.b16 %v511, %v510
    %v514 = vpack.c.b16 %v512, %v512
    %v517 = vsel %vm306, %v506, 0
    %v520 = vsel %vm310, %v514, 0
    %522 = vmatprep.subr.bf16.mxu0 0
    %523 = vmatpush1.bf16.msra.mxu0 %v513
    %524 = vmatprep.subr.bf16.mxu0 0
    %525 = vmatpush1.bf16.msra.mxu0 %v520
    %526 = vmatprep.subr.bf16.mxu0 0
    %527 = vmatpush1.bf16.msra.mxu0 0
    %528 = vmatprep.subr.bf16.mxu0 0
    %529 = vmatpush1.bf16.msra.mxu0 0
    %530 = vmatprep.subr.bf16.mxu0 0
    %531 = vmatpush1.bf16.msra.mxu0 0
    %532 = vmatprep.subr.bf16.mxu0 0
    %533 = vmatpush1.bf16.msra.mxu0 0
    %534 = vmatprep.subr.bf16.mxu0 0
    %535 = vmatpush1.bf16.msra.mxu0 0
    %536 = vmatprep.subr.bf16.mxu0 0
    %537 = vmatpush1.bf16.msra.mxu0 0
    %538 = vmatprep.subr.bf16.mxu0 0
    %539 = vmatpush1.bf16.msra.mxu0 0
    %540 = vmatprep.subr.bf16.mxu0 0
    %541 = vmatpush1.bf16.msra.mxu0 0
    %542 = vmatprep.subr.bf16.mxu0 0
    %543 = vmatpush1.bf16.msra.mxu0 0
    %544 = vmatprep.subr.bf16.mxu0 0
    %545 = vmatpush1.bf16.msra.mxu0 0
    %546 = vmatprep.subr.bf16.mxu0 0
    %547 = vmatpush1.bf16.msra.mxu0 0
    %548 = vmatprep.subr.bf16.mxu0 0
    %549 = vmatpush1.bf16.msra.mxu0 0
    %550 = vmatprep.subr.bf16.mxu0 0
    %551 = vmatpush1.bf16.msra.mxu0 0
    %552 = vmatprep.subr.bf16.mxu0 0
    %553 = vmatpush1.bf16.msra.mxu0 0
    %554 = vmatprep.mubr.bf16.mxu0 0
    %555 = vmatmul.mubr.bf16.gmra.mrb[0].mxu0 %v517
    %v556 = vpop.f32.mrb[0].mxu0
    %v557 = vadd.f32 0.0, %v556
    %v558 = vpop.f32.mrb[0].mxu0
    %v559 = vpop.f32.mrb[0].mxu0
    %v560 = vadd.f32 0.0, %v559
    %v561 = vpop.f32.mrb[0].mxu0
    %562 = vdwg.mxu0
    %v563 = vpack.c.bf16 %v560, %v557
    %v565 = vlaneseq
    %v566 = vshrl.u32 %v565, 7
    %v567 = vsub.s32 0, %v566
    %v568 = vrot.slane %v362, %v567
    %v572 = vunpack.c.l.b16 %v270
    %v573 = vunpack.c.l.b16 %v271
    %v574 = vpack.c.b16 %v573, %v572
    %v576 = vsel %vm386, %v574, 0
    %578 = vmatprep.subr.bf16.mxu0 0
    %579 = vmatpush1.bf16.msra.mxu0 %v563
    %580 = vmatprep.subr.bf16.mxu0 0
    %581 = vmatpush1.bf16.msra.mxu0 0
    %582 = vmatprep.subr.bf16.mxu0 0
    %583 = vmatpush1.bf16.msra.mxu0 0
    %584 = vmatprep.subr.bf16.mxu0 0
    %585 = vmatpush1.bf16.msra.mxu0 0
    %586 = vmatprep.subr.bf16.mxu0 0
    %587 = vmatpush1.bf16.msra.mxu0 0
    %588 = vmatprep.subr.bf16.mxu0 0
    %589 = vmatpush1.bf16.msra.mxu0 0
    %590 = vmatprep.subr.bf16.mxu0 0
    %591 = vmatpush1.bf16.msra.mxu0 0
    %592 = vmatprep.subr.bf16.mxu0 0
    %593 = vmatpush1.bf16.msra.mxu0 0
    %594 = vmatprep.subr.bf16.mxu0 0
    %595 = vmatpush1.bf16.msra.mxu0 0
    %596 = vmatprep.subr.bf16.mxu0 0
    %597 = vmatpush1.bf16.msra.mxu0 0
    %598 = vmatprep.subr.bf16.mxu0 0
    %599 = vmatpush1.bf16.msra.mxu0 0
    %600 = vmatprep.subr.bf16.mxu0 0
    %601 = vmatpush1.bf16.msra.mxu0 0
    %602 = vmatprep.subr.bf16.mxu0 0
    %603 = vmatpush1.bf16.msra.mxu0 0
    %604 = vmatprep.subr.bf16.mxu0 0
    %605 = vmatpush1.bf16.msra.mxu0 0
    %606 = vmatprep.subr.bf16.mxu0 0
    %607 = vmatpush1.bf16.msra.mxu0 0
    %608 = vmatprep.subr.bf16.mxu0 0
    %609 = vmatpush1.bf16.msra.mxu0 0
    %610 = vmatprep.mubr.bf16.mxu0 0
    %611 = vmatmul.mubr.bf16.gmra.mrb[0].mxu0 %v576
    %v612 = vpop.f32.mrb[0].mxu0
    %v613 = vadd.f32 %v568, %v612
    %v614 = vpop.f32.mrb[0].mxu0
    %v615 = vpop.f32.mrb[0].mxu0
    %v616 = vadd.f32 %v568, %v615
    %v617 = vpop.f32.mrb[0].mxu0
    %618 = vdwg.mxu0
    %vm619 = vcmp.ge.f32.partialorder %v613, 0.0
    %vm620 = vcmp.ge.f32.partialorder %v616, 0.0
    %v621 = vmul.f32 %v613, 0.01
    %v622 = vmul.f32 %v616, 0.01
    %v623 = vsel %vm619, %v613, %v621
    %v624 = vsel %vm620, %v616, %v622
    %s625 = scalar_lea.vmem [#allocation6], 8
    %v626 = vld [vmem:[%s625] sm:$0xf]
    %v627 = vld [vmem:[%s625 + $0x4] sm:$0xf]
    %s628 = scalar_lea.vmem %s8, 16
    %v629 = vld [vmem:[%s628] sm:$0xff]
    %v630 = vld [vmem:[%s628 + $0x8] sm:$0xff]
    %s631 = scalar_lea.vmem %s9, 12
    %v632 = vld [vmem:[%s631] sm:$0xf]
    %v633 = vld [vmem:[%s631 + $0x4] sm:$0xf]
    %v634 = vld [vmem:[%s631 + $0x8] sm:$0xf]
    %s635 = scalar_lea.vmem [#allocation7], 1
    %v636 = vld [vmem:[%s635] sm:$0x1]
    %v637 = vpack.c.bf16 %v624, %v623
    %v640 = vunpack.c.l.b16 %v626
    %v641 = vunpack.c.l.b16 %v627
    %v642 = vpack.c.b16 %v641, %v640
    %644 = vxpose.xlu0.c.b16.start [1/8] %v642, 128
    %645 = vxpose.xlu0.c.b16.cont [2/8] 0, 128
    %646 = vxpose.xlu0.c.b16.cont [3/8] 0, 128
    %647 = vxpose.xlu0.c.b16.cont [4/8] 0, 128
    %648 = vxpose.xlu0.c.b16.cont [5/8] 0, 128
    %649 = vxpose.xlu0.c.b16.cont [6/8] 0, 128
    %650 = vxpose.xlu0.c.b16.cont [7/8] 0, 128
    %651 = vxpose.xlu0.c.b16.end [8/8] 0, 128
    %v652 = vpop.trf.xlu0
    %v653 = vpop.trf.xlu0
    %v654 = vpop.trf.xlu0
    %v655 = vpop.trf.xlu0
    %v656 = vpop.trf.xlu0
    %v657 = vpop.trf.xlu0
    %v658 = vpop.trf.xlu0
    %v659 = vpop.trf.xlu0
    %v661 = vsel %vm386, %v652, 0
    %663 = vmatprep.subr.bf16.mxu0 0
    %664 = vmatpush1.bf16.msra.mxu0 %v637
    %665 = vmatprep.subr.bf16.mxu0 0
    %666 = vmatpush1.bf16.msra.mxu0 0
    %667 = vmatprep.subr.bf16.mxu0 0
    %668 = vmatpush1.bf16.msra.mxu0 0
    %669 = vmatprep.subr.bf16.mxu0 0
    %670 = vmatpush1.bf16.msra.mxu0 0
    %671 = vmatprep.subr.bf16.mxu0 0
    %672 = vmatpush1.bf16.msra.mxu0 0
    %673 = vmatprep.subr.bf16.mxu0 0
    %674 = vmatpush1.bf16.msra.mxu0 0
    %675 = vmatprep.subr.bf16.mxu0 0
    %676 = vmatpush1.bf16.msra.mxu0 0
    %677 = vmatprep.subr.bf16.mxu0 0
    %678 = vmatpush1.bf16.msra.mxu0 0
    %679 = vmatprep.subr.bf16.mxu0 0
    %680 = vmatpush1.bf16.msra.mxu0 0
    %681 = vmatprep.subr.bf16.mxu0 0
    %682 = vmatpush1.bf16.msra.mxu0 0
    %683 = vmatprep.subr.bf16.mxu0 0
    %684 = vmatpush1.bf16.msra.mxu0 0
    %685 = vmatprep.subr.bf16.mxu0 0
    %686 = vmatpush1.bf16.msra.mxu0 0
    %687 = vmatprep.subr.bf16.mxu0 0
    %688 = vmatpush1.bf16.msra.mxu0 0
    %689 = vmatprep.subr.bf16.mxu0 0
    %690 = vmatpush1.bf16.msra.mxu0 0
    %691 = vmatprep.subr.bf16.mxu0 0
    %692 = vmatpush1.bf16.msra.mxu0 0
    %693 = vmatprep.subr.bf16.mxu0 0
    %694 = vmatpush1.bf16.msra.mxu0 0
    %695 = vmatprep.mubr.bf16.mxu0 0
    %696 = vmatmul.mubr.bf16.gmra.mrb[0].mxu0 %v661
    %v697 = vpop.f32.mrb[0].mxu0
    %v698 = vadd.f32 0.0, %v697
    %v699 = vpop.f32.mrb[0].mxu0
    %v700 = vpop.f32.mrb[0].mxu0
    %v701 = vadd.f32 0.0, %v700
    %v702 = vpop.f32.mrb[0].mxu0
    %703 = vdwg.mxu0
    %v704 = vpack.c.bf16 %v701, %v698
    %706 = vset.pattern.permute.xlu0 0
    %707 = vperm.xlu0 %706, %v629
    %v708 = vpop.permute.xlu0 %707
    %711 = vset.pattern.permute.xlu0 0
    %712 = vperm.xlu0 %711, %v630
    %v713 = vpop.permute.xlu0 %712
    %v716 = vsel %vm306, %v704, 0
    %718 = vmatprep.subr.bf16.mxu0 0
    %719 = vmatpush1.bf16.xpose.msra.mxu0 %v454
    %720 = vmatprep.subr.bf16.mxu0 0
    %721 = vmatpush1.bf16.xpose.msra.mxu0 %v457
    %722 = vmatprep.subr.bf16.mxu0 0
    %723 = vmatpush1.bf16.xpose.msra.mxu0 0
    %724 = vmatprep.subr.bf16.mxu0 0
    %725 = vmatpush1.bf16.xpose.msra.mxu0 0
    %726 = vmatprep.subr.bf16.mxu0 0
    %727 = vmatpush1.bf16.xpose.msra.mxu0 0
    %728 = vmatprep.subr.bf16.mxu0 0
    %729 = vmatpush1.bf16.xpose.msra.mxu0 0
    %730 = vmatprep.subr.bf16.mxu0 0
    %731 = vmatpush1.bf16.xpose.msra.mxu0 0
    %732 = vmatprep.subr.bf16.mxu0 0
    %733 = vmatpush1.bf16.xpose.msra.mxu0 0
    %734 = vmatprep.subr.bf16.mxu0 0
    %735 = vmatpush1.bf16.xpose.msra.mxu0 0
    %736 = vmatprep.subr.bf16.mxu0 0
    %737 = vmatpush1.bf16.xpose.msra.mxu0 0
    %738 = vmatprep.subr.bf16.mxu0 0
    %739 = vmatpush1.bf16.xpose.msra.mxu0 0
    %740 = vmatprep.subr.bf16.mxu0 0
    %741 = vmatpush1.bf16.xpose.msra.mxu0 0
    %742 = vmatprep.subr.bf16.mxu0 0
    %743 = vmatpush1.bf16.xpose.msra.mxu0 0
    %744 = vmatprep.subr.bf16.mxu0 0
    %745 = vmatpush1.bf16.xpose.msra.mxu0 0
    %746 = vmatprep.subr.bf16.mxu0 0
    %747 = vmatpush1.bf16.xpose.msra.mxu0 0
    %748 = vmatprep.subr.bf16.mxu0 0
    %749 = vmatpush1.bf16.xpose.msra.mxu0 0
    %750 = vmatprep.mubr.bf16.mxu0 0
    %751 = vmatmul.mubr.bf16.gmra.mrb[0].mxu0 %v716
    %v752 = vpop.f32.mrb[0].mxu0
    %v753 = vadd.f32 %v708, %v752
    %v754 = vpop.f32.mrb[0].mxu0
    %v755 = vpop.f32.mrb[0].mxu0
    %v756 = vadd.f32 %v713, %v755
    %v757 = vpop.f32.mrb[0].mxu0
    %758 = vdwg.mxu0
    %vm759 = vcmp.ge.f32.partialorder %v753, 0.0
    %vm760 = vcmp.ge.f32.partialorder %v756, 0.0
    %v761 = vmul.f32 %v753, 0.01
    %v762 = vmul.f32 %v756, 0.01
    %v763 = vsel %vm759, %v753, %v761
    %v764 = vsel %vm760, %v756, %v762
    %v765 = vpack.c.bf16 %v764, %v763
    %v769 = vunpack.c.l.b16 %v632
    %v770 = vunpack.c.l.b16 %v633
    %v771 = vunpack.c.l.b16 %v634
    %v772 = vpack.c.b16 %v770, %v769
    %v773 = vpack.c.b16 %v771, %v771
    %v776 = vsel %vm306, %v765, 0
    %v779 = vsel %vm310, %v773, 0
    %781 = vmatprep.subr.bf16.mxu0 0
    %782 = vmatpush1.bf16.msra.mxu0 %v772
    %783 = vmatprep.subr.bf16.mxu0 0
    %784 = vmatpush1.bf16.msra.mxu0 %v779
    %785 = vmatprep.subr.bf16.mxu0 0
    %786 = vmatpush1.bf16.msra.mxu0 0
    %787 = vmatprep.subr.bf16.mxu0 0
    %788 = vmatpush1.bf16.msra.mxu0 0
    %789 = vmatprep.subr.bf16.mxu0 0
    %790 = vmatpush1.bf16.msra.mxu0 0
    %791 = vmatprep.subr.bf16.mxu0 0
    %792 = vmatpush1.bf16.msra.mxu0 0
    %793 = vmatprep.subr.bf16.mxu0 0
    %794 = vmatpush1.bf16.msra.mxu0 0
    %795 = vmatprep.subr.bf16.mxu0 0
    %796 = vmatpush1.bf16.msra.mxu0 0
    %797 = vmatprep.subr.bf16.mxu0 0
    %798 = vmatpush1.bf16.msra.mxu0 0
    %799 = vmatprep.subr.bf16.mxu0 0
    %800 = vmatpush1.bf16.msra.mxu0 0
    %801 = vmatprep.subr.bf16.mxu0 0
    %802 = vmatpush1.bf16.msra.mxu0 0
    %803 = vmatprep.subr.bf16.mxu0 0
    %804 = vmatpush1.bf16.msra.mxu0 0
    %805 = vmatprep.subr.bf16.mxu0 0
    %806 = vmatpush1.bf16.msra.mxu0 0
    %807 = vmatprep.subr.bf16.mxu0 0
    %808 = vmatpush1.bf16.msra.mxu0 0
    %809 = vmatprep.subr.bf16.mxu0 0
    %810 = vmatpush1.bf16.msra.mxu0 0
    %811 = vmatprep.subr.bf16.mxu0 0
    %812 = vmatpush1.bf16.msra.mxu0 0
    %813 = vmatprep.mubr.bf16.mxu0 0
    %814 = vmatmul.mubr.bf16.gmra.mrb[0].mxu0 %v776
    %v815 = vpop.f32.mrb[0].mxu0
    %v816 = vadd.f32 0.0, %v815
    %v817 = vpop.f32.mrb[0].mxu0
    %v818 = vpop.f32.mrb[0].mxu0
    %v819 = vadd.f32 0.0, %v818
    %v820 = vpop.f32.mrb[0].mxu0
    %821 = vdwg.mxu0
    %v822 = vpack.c.bf16 %v819, %v816
    %v824 = vlaneseq
    %v825 = vshrl.u32 %v824, 7
    %v826 = vsub.s32 0, %v825
    %v827 = vrot.slane %v636, %v826
    %829 = vmatprep.subr.bf16.mxu0 0
    %830 = vmatpush1.bf16.msra.mxu0 %v822
    %831 = vmatprep.subr.bf16.mxu0 0
    %832 = vmatpush1.bf16.msra.mxu0 0
    %833 = vmatprep.subr.bf16.mxu0 0
    %834 = vmatpush1.bf16.msra.mxu0 0
    %835 = vmatprep.subr.bf16.mxu0 0
    %836 = vmatpush1.bf16.msra.mxu0 0
    %837 = vmatprep.subr.bf16.mxu0 0
    %838 = vmatpush1.bf16.msra.mxu0 0
    %839 = vmatprep.subr.bf16.mxu0 0
    %840 = vmatpush1.bf16.msra.mxu0 0
    %841 = vmatprep.subr.bf16.mxu0 0
    %842 = vmatpush1.bf16.msra.mxu0 0
    %843 = vmatprep.subr.bf16.mxu0 0
    %844 = vmatpush1.bf16.msra.mxu0 0
    %845 = vmatprep.subr.bf16.mxu0 0
    %846 = vmatpush1.bf16.msra.mxu0 0
    %847 = vmatprep.subr.bf16.mxu0 0
    %848 = vmatpush1.bf16.msra.mxu0 0
    %849 = vmatprep.subr.bf16.mxu0 0
    %850 = vmatpush1.bf16.msra.mxu0 0
    %851 = vmatprep.subr.bf16.mxu0 0
    %852 = vmatpush1.bf16.msra.mxu0 0
    %853 = vmatprep.subr.bf16.mxu0 0
    %854 = vmatpush1.bf16.msra.mxu0 0
    %855 = vmatprep.subr.bf16.mxu0 0
    %856 = vmatpush1.bf16.msra.mxu0 0
    %857 = vmatprep.subr.bf16.mxu0 0
    %858 = vmatpush1.bf16.msra.mxu0 0
    %859 = vmatprep.subr.bf16.mxu0 0
    %860 = vmatpush1.bf16.msra.mxu0 0
    %861 = vmatprep.mubr.bf16.mxu0 0
    %862 = vmatmul.mubr.bf16.gmra.mrb[0].mxu0 %v576
    %v863 = vpop.f32.mrb[0].mxu0
    %v864 = vadd.f32 %v827, %v863
    %v865 = vpop.f32.mrb[0].mxu0
    %v866 = vpop.f32.mrb[0].mxu0
    %v867 = vadd.f32 %v827, %v866
    %v868 = vpop.f32.mrb[0].mxu0
    %869 = vdwg.mxu0
    %vm870 = vcmp.ge.f32.partialorder %v864, 0.0
    %vm871 = vcmp.ge.f32.partialorder %v867, 0.0
    %v872 = vmul.f32 %v864, 0.01
    %v873 = vmul.f32 %v867, 0.01
    %v874 = vsel %vm870, %v864, %v872
    %v875 = vsel %vm871, %v867, %v873
    %v876 = vld [vmem:[#allocation9] sm:$0xf]
    %v877 = vld [vmem:[#allocation9 + $0x4] sm:$0xf]
    %v878 = vld [vmem:[#allocation9 + $0x8] sm:$0xf]
    %v879 = vpack.c.bf16 %v875, %v874
    %v883 = vunpack.c.l.b16 %v876
    %v884 = vunpack.c.l.b16 %v877
    %v885 = vunpack.c.l.b16 %v878
    %v886 = vpack.c.b16 %v884, %v883
    %v887 = vpack.c.b16 %v885, %v885
    %v890 = vsel %vm306, %v879, 0
    %v893 = vsel %vm310, %v887, 0
    %895 = vmatprep.subr.bf16.mxu0 0
    %896 = vmatpush1.bf16.msra.mxu0 %v886
    %897 = vmatprep.subr.bf16.mxu0 0
    %898 = vmatpush1.bf16.msra.mxu0 %v893
    %899 = vmatprep.subr.bf16.mxu0 0
    %900 = vmatpush1.bf16.msra.mxu0 0
    %901 = vmatprep.subr.bf16.mxu0 0
    %902 = vmatpush1.bf16.msra.mxu0 0
    %903 = vmatprep.subr.bf16.mxu0 0
    %904 = vmatpush1.bf16.msra.mxu0 0
    %905 = vmatprep.subr.bf16.mxu0 0
    %906 = vmatpush1.bf16.msra.mxu0 0
    %907 = vmatprep.subr.bf16.mxu0 0
    %908 = vmatpush1.bf16.msra.mxu0 0
    %909 = vmatprep.subr.bf16.mxu0 0
    %910 = vmatpush1.bf16.msra.mxu0 0
    %911 = vmatprep.subr.bf16.mxu0 0
    %912 = vmatpush1.bf16.msra.mxu0 0
    %913 = vmatprep.subr.bf16.mxu0 0
    %914 = vmatpush1.bf16.msra.mxu0 0
    %915 = vmatprep.subr.bf16.mxu0 0
    %916 = vmatpush1.bf16.msra.mxu0 0
    %917 = vmatprep.subr.bf16.mxu0 0
    %918 = vmatpush1.bf16.msra.mxu0 0
    %919 = vmatprep.subr.bf16.mxu0 0
    %920 = vmatpush1.bf16.msra.mxu0 0
    %921 = vmatprep.subr.bf16.mxu0 0
    %922 = vmatpush1.bf16.msra.mxu0 0
    %923 = vmatprep.subr.bf16.mxu0 0
    %924 = vmatpush1.bf16.msra.mxu0 0
    %925 = vmatprep.subr.bf16.mxu0 0
    %926 = vmatpush1.bf16.msra.mxu0 0
    %927 = vmatprep.mubr.bf16.mxu0 0
    %928 = vmatmul.mubr.bf16.gmra.mrb[0].mxu0 %v890
    %v929 = vpop.f32.mrb[0].mxu0
    %v930 = vadd.f32 0.0, %v929
    %v931 = vpop.f32.mrb[0].mxu0
    %v932 = vpop.f32.mrb[0].mxu0
    %v933 = vadd.f32 0.0, %v932
    %v934 = vpop.f32.mrb[0].mxu0
    %935 = vdwg.mxu0
    %v936 = vpack.c.bf16 %v933, %v930
    %v937 = vld [vmem:[#allocation10] sm:$0x1]
    %v939 = vlaneseq
    %v940 = vshrl.u32 %v939, 7
    %v941 = vsub.s32 0, %v940
    %v942 = vrot.slane %v937, %v941
    %944 = vmatprep.subr.bf16.mxu0 0
    %945 = vmatpush1.bf16.msra.mxu0 %v936
    %946 = vmatprep.subr.bf16.mxu0 0
    %947 = vmatpush1.bf16.msra.mxu0 0
    %948 = vmatprep.subr.bf16.mxu0 0
    %949 = vmatpush1.bf16.msra.mxu0 0
    %950 = vmatprep.subr.bf16.mxu0 0
    %951 = vmatpush1.bf16.msra.mxu0 0
    %952 = vmatprep.subr.bf16.mxu0 0
    %953 = vmatpush1.bf16.msra.mxu0 0
    %954 = vmatprep.subr.bf16.mxu0 0
    %955 = vmatpush1.bf16.msra.mxu0 0
    %956 = vmatprep.subr.bf16.mxu0 0
    %957 = vmatpush1.bf16.msra.mxu0 0
    %958 = vmatprep.subr.bf16.mxu0 0
    %959 = vmatpush1.bf16.msra.mxu0 0
    %960 = vmatprep.subr.bf16.mxu0 0
    %961 = vmatpush1.bf16.msra.mxu0 0
    %962 = vmatprep.subr.bf16.mxu0 0
    %963 = vmatpush1.bf16.msra.mxu0 0
    %964 = vmatprep.subr.bf16.mxu0 0
    %965 = vmatpush1.bf16.msra.mxu0 0
    %966 = vmatprep.subr.bf16.mxu0 0
    %967 = vmatpush1.bf16.msra.mxu0 0
    %968 = vmatprep.subr.bf16.mxu0 0
    %969 = vmatpush1.bf16.msra.mxu0 0
    %970 = vmatprep.subr.bf16.mxu0 0
    %971 = vmatpush1.bf16.msra.mxu0 0
    %972 = vmatprep.subr.bf16.mxu0 0
    %973 = vmatpush1.bf16.msra.mxu0 0
    %974 = vmatprep.subr.bf16.mxu0 0
    %975 = vmatpush1.bf16.msra.mxu0 0
    %976 = vmatprep.mubr.bf16.mxu0 0
    %977 = vmatmul.mubr.bf16.gmra.mrb[0].mxu0 %v576
    %v978 = vpop.f32.mrb[0].mxu0
    %v979 = vadd.f32 %v942, %v978
    %v980 = vpop.f32.mrb[0].mxu0
    %v981 = vpop.f32.mrb[0].mxu0
    %v982 = vadd.f32 %v942, %v981
    %v983 = vpop.f32.mrb[0].mxu0
    %984 = vdwg.mxu0
    %vm985 = vcmp.ge.f32.partialorder %v979, 0.0
    %vm986 = vcmp.ge.f32.partialorder %v982, 0.0
    %v987 = vmul.f32 %v979, 0.01
    %v988 = vmul.f32 %v982, 0.01
    %v989 = vsel %vm985, %v979, %v987
    %v990 = vsel %vm986, %v982, %v988
    %v991 = vld [vmem:[%s13] sm:$0xff]
    %v992 = vld [vmem:[%s13 + $0x8] sm:$0xff]
    %v993 = vld [vmem:[%s13 + $0x10] sm:$0xff]
    %v994 = vld [vmem:[%s13 + $0x18] sm:$0xff]
    %v995 = vld [vmem:[%s13 + $0x20] sm:$0xff]
    %v996 = vld [vmem:[%s13 + $0x28] sm:$0xff]
    %v997 = vld [vmem:[%s13 + $0x30] sm:$0xff]
    %v998 = vld [vmem:[%s13 + $0x38] sm:$0xff]
    %v999 = vpack.c.bf16 %v990, %v989
    %v1000 = vld [vmem:[#allocation12] sm:$0xf]
    %v1002 = vlaneseq
    %v1003 = vshrl.u32 %v1002, 7
    %v1004 = vsub.s32 0, %v1003
    %v1005 = vrot.slane %v1000, %v1004
    %v1006 = vlaneseq
    %v1007 = vshrl.u32 %v1006, 7
    %v1008 = vsub.s32 1, %v1007
    %v1009 = vrot.slane %v1000, %v1008
    %v1010 = vlaneseq
    %v1011 = vshrl.u32 %v1010, 7
    %v1012 = vsub.s32 2, %v1011
    %v1013 = vrot.slane %v1000, %v1012
    %v1014 = vlaneseq
    %v1015 = vshrl.u32 %v1014, 7
    %v1016 = vsub.s32 3, %v1015
    %v1017 = vrot.slane %v1000, %v1016
    %v1030 = vunpack.c.l.b16 %v991
    %v1031 = vunpack.c.h.b16 %v991
    %v1032 = vunpack.c.l.b16 %v992
    %v1033 = vunpack.c.h.b16 %v992
    %v1034 = vunpack.c.l.b16 %v993
    %v1035 = vunpack.c.h.b16 %v993
    %v1036 = vunpack.c.l.b16 %v994
    %v1037 = vunpack.c.h.b16 %v994
    %v1038 = vunpack.c.l.b16 %v995
    %v1039 = vunpack.c.h.b16 %v995
    %v1040 = vunpack.c.l.b16 %v996
    %v1041 = vunpack.c.h.b16 %v996
    %v1042 = vunpack.c.l.b16 %v997
    %v1043 = vunpack.c.h.b16 %v997
    %v1044 = vunpack.c.l.b16 %v998
    %v1045 = vunpack.c.h.b16 %v998
    %v1046 = vpack.c.b16 %v1034, %v1030
    %v1047 = vpack.c.b16 %v1035, %v1031
    %v1048 = vpack.c.b16 %v1036, %v1032
    %v1049 = vpack.c.b16 %v1037, %v1033
    %v1050 = vpack.c.b16 %v1042, %v1038
    %v1051 = vpack.c.b16 %v1043, %v1039
    %v1052 = vpack.c.b16 %v1044, %v1040
    %v1053 = vpack.c.b16 %v1045, %v1041
    %vm1062 = vcmask 261120
    %v1064 = vsel %vm1062, %v999, 0
    %1066 = vmatprep.subr.bf16.mxu0 %v1047
    %1067 = vmatpush1.bf16.msra.mxu0 %v1046
    %1068 = vmatprep.subr.bf16.mxu0 %v1051
    %1069 = vmatpush1.bf16.msra.mxu0 %v1050
    %1070 = vmatprep.subr.bf16.mxu0 0
    %1071 = vmatpush1.bf16.msra.mxu0 0
    %1072 = vmatprep.subr.bf16.mxu0 0
    %1073 = vmatpush1.bf16.msra.mxu0 0
    %1074 = vmatprep.subr.bf16.mxu0 0
    %1075 = vmatpush1.bf16.msra.mxu0 0
    %1076 = vmatprep.subr.bf16.mxu0 0
    %1077 = vmatpush1.bf16.msra.mxu0 0
    %1078 = vmatprep.subr.bf16.mxu0 0
    %1079 = vmatpush1.bf16.msra.mxu0 0
    %1080 = vmatprep.subr.bf16.mxu0 0
    %1081 = vmatpush1.bf16.msra.mxu0 0
    %1082 = vmatprep.subr.bf16.mxu0 0
    %1083 = vmatpush1.bf16.msra.mxu0 0
    %1084 = vmatprep.subr.bf16.mxu0 0
    %1085 = vmatpush1.bf16.msra.mxu0 0
    %1086 = vmatprep.subr.bf16.mxu0 0
    %1087 = vmatpush1.bf16.msra.mxu0 0
    %1088 = vmatprep.subr.bf16.mxu0 0
    %1089 = vmatpush1.bf16.msra.mxu0 0
    %1090 = vmatprep.subr.bf16.mxu0 0
    %1091 = vmatpush1.bf16.msra.mxu0 0
    %1092 = vmatprep.subr.bf16.mxu0 0
    %1093 = vmatpush1.bf16.msra.mxu0 0
    %1094 = vmatprep.subr.bf16.mxu0 0
    %1095 = vmatpush1.bf16.msra.mxu0 0
    %1096 = vmatprep.subr.bf16.mxu0 0
    %1097 = vmatpush1.bf16.msra.mxu0 0
    %1098 = vmatprep.mubr.bf16.mxu0 0
    %1099 = vmatmul.mubr.bf16.gmra.mrb[0].mxu0 %v1064
    %v1100 = vpop.f32.mrb[0].mxu0
    %v1101 = vadd.f32 %v1005, %v1100
    %v1102 = vpop.f32.mrb[0].mxu0
    %v1103 = vadd.f32 %v1009, %v1102
    %v1104 = vpop.f32.mrb[0].mxu0
    %v1105 = vadd.f32 %v1005, %v1104
    %v1106 = vpop.f32.mrb[0].mxu0
    %v1107 = vadd.f32 %v1009, %v1106
    %1108 = vdwg.mxu0
    %1109 = vmatprep.subr.bf16.mxu0 %v1049
    %1110 = vmatpush1.bf16.msra.mxu0 %v1048
    %1111 = vmatprep.subr.bf16.mxu0 %v1053
    %1112 = vmatpush1.bf16.msra.mxu0 %v1052
    %1113 = vmatprep.subr.bf16.mxu0 0
    %1114 = vmatpush1.bf16.msra.mxu0 0
    %1115 = vmatprep.subr.bf16.mxu0 0
    %1116 = vmatpush1.bf16.msra.mxu0 0
    %1117 = vmatprep.subr.bf16.mxu0 0
    %1118 = vmatpush1.bf16.msra.mxu0 0
    %1119 = vmatprep.subr.bf16.mxu0 0
    %1120 = vmatpush1.bf16.msra.mxu0 0
    %1121 = vmatprep.subr.bf16.mxu0 0
    %1122 = vmatpush1.bf16.msra.mxu0 0
    %1123 = vmatprep.subr.bf16.mxu0 0
    %1124 = vmatpush1.bf16.msra.mxu0 0
    %1125 = vmatprep.subr.bf16.mxu0 0
    %1126 = vmatpush1.bf16.msra.mxu0 0
    %1127 = vmatprep.subr.bf16.mxu0 0
    %1128 = vmatpush1.bf16.msra.mxu0 0
    %1129 = vmatprep.subr.bf16.mxu0 0
    %1130 = vmatpush1.bf16.msra.mxu0 0
    %1131 = vmatprep.subr.bf16.mxu0 0
    %1132 = vmatpush1.bf16.msra.mxu0 0
    %1133 = vmatprep.subr.bf16.mxu0 0
    %1134 = vmatpush1.bf16.msra.mxu0 0
    %1135 = vmatprep.subr.bf16.mxu0 0
    %1136 = vmatpush1.bf16.msra.mxu0 0
    %1137 = vmatprep.subr.bf16.mxu0 0
    %1138 = vmatpush1.bf16.msra.mxu0 0
    %1139 = vmatprep.subr.bf16.mxu0 0
    %1140 = vmatpush1.bf16.msra.mxu0 0
    %1141 = vmatprep.mubr.bf16.mxu0 0
    %1142 = vmatmul.mubr.bf16.gmra.mrb[0].mxu0 %v1064
    %v1143 = vpop.f32.mrb[0].mxu0
    %v1144 = vadd.f32 %v1013, %v1143
    %v1145 = vpop.f32.mrb[0].mxu0
    %v1146 = vadd.f32 %v1017, %v1145
    %v1147 = vpop.f32.mrb[0].mxu0
    %v1148 = vadd.f32 %v1013, %v1147
    %v1149 = vpop.f32.mrb[0].mxu0
    %v1150 = vadd.f32 %v1017, %v1149
    %1151 = vdwg.mxu0
    %v1152 = vpack.c.bf16 %v1105, %v1101
    %v1153 = vpack.c.bf16 %v1107, %v1103
    %1154 = vmatprep.subr.bf16.mxu0 0
    %1155 = vmatpush1.bf16.xpose.msra.mxu0 %v1153
    %1156 = vmatprep.subr.bf16.mxu0 0
    %1157 = vmatpush1.bf16.xpose.msra.mxu0 0
    %1158 = vmatprep.subr.bf16.mxu0 0
    %1159 = vmatpush1.bf16.xpose.msra.mxu0 0
    %1160 = vmatprep.subr.bf16.mxu0 0
    %1161 = vmatpush1.bf16.xpose.msra.mxu0 0
    %1162 = vmatprep.subr.bf16.mxu0 0
    %1163 = vmatpush1.bf16.xpose.msra.mxu0 0
    %1164 = vmatprep.subr.bf16.mxu0 0
    %1165 = vmatpush1.bf16.xpose.msra.mxu0 0
    %1166 = vmatprep.subr.bf16.mxu0 0
    %1167 = vmatpush1.bf16.xpose.msra.mxu0 0
    %1168 = vmatprep.subr.bf16.mxu0 0
    %1169 = vmatpush1.bf16.xpose.msra.mxu0 0
    %1170 = vmatprep.subr.bf16.mxu0 0
    %1171 = vmatpush1.bf16.xpose.msra.mxu0 0
    %1172 = vmatprep.subr.bf16.mxu0 0
    %1173 = vmatpush1.bf16.xpose.msra.mxu0 0
    %1174 = vmatprep.subr.bf16.mxu0 0
    %1175 = vmatpush1.bf16.xpose.msra.mxu0 0
    %1176 = vmatprep.subr.bf16.mxu0 0
    %1177 = vmatpush1.bf16.xpose.msra.mxu0 0
    %1178 = vmatprep.subr.bf16.mxu0 0
    %1179 = vmatpush1.bf16.xpose.msra.mxu0 0
    %1180 = vmatprep.subr.bf16.mxu0 0
    %1181 = vmatpush1.bf16.xpose.msra.mxu0 0
    %1182 = vmatprep.subr.bf16.mxu0 0
    %1183 = vmatpush1.bf16.xpose.msra.mxu0 0
    %1184 = vmatprep.subr.bf16.mxu0 0
    %1185 = vmatpush1.bf16.xpose.msra.mxu0 0
    %1186 = vmatprep.mubr.bf16.mxu0 0
    %1187 = vmatmul.mubr.bf16.gmra.mrb[0].mxu0 %v1152
    %v1188 = vpop.f32.mrb[0].mxu0
    %v1189 = vadd.f32 0.0, %v1188
    %v1190 = vpop.f32.mrb[0].mxu0
    %v1191 = vpop.f32.mrb[0].mxu0
    %v1192 = vadd.f32 0.0, %v1191
    %v1193 = vpop.f32.mrb[0].mxu0
    %1194 = vdwg.mxu0
    %v1195 = vmul.f32 %v1189, 0.35355338
    %v1196 = vmul.f32 %v1192, 0.35355338
    %v1197 = vsub.f32 %v272, 1.0
    %v1198 = vsub.f32 %v273, 1.0
    %v1199 = vmul.f32 %v1197, 1e+30
    %v1200 = vmul.f32 %v1198, 1e+30
    %v1201 = vadd.f32 %v1195, %v1199
    %v1202 = vadd.f32 %v1196, %v1200
    %v1203 = vsel %vm386, %v1201, -inf
    %1204 = vmax.xlane.f32.xlu0 %v1203
    %v1205 = vpop.xlane.xlu0 %1204
    %v1206 = vsel %vm386, %v1202, -inf
    %1207 = vmax.xlane.f32.xlu0 %v1206
    %v1208 = vpop.xlane.xlu0 %1207
    %v1209 = vsub.f32 %v1201, %v1205
    %v1210 = vsub.f32 %v1202, %v1208
    %v1211 = vmul.f32 %v1209, 1.442695
    %v1212 = vpow.pop %v1211
    %v1213 = vmul.f32 %v1210, 1.442695
    %v1214 = vpow.pop %v1213
    %v1215 = vmul.f32 %v1212, %v272
    %v1216 = vmul.f32 %v1214, %v273
    %v1217 = vsel %vm386, %v1215, 0.0
    %1218 = vadd.xlane.f32.xlu0 %v1217
    %v1219 = vpop.xlane.xlu0 %1218
    %v1220 = vsel %vm386, %v1216, 0.0
    %1221 = vadd.xlane.f32.xlu0 %v1220
    %v1222 = vpop.xlane.xlu0 %1221
    %v1223 = vmax.f32 %v1219, 1e-16
    %v1224 = vmax.f32 %v1222, 1e-16
    %v1225 = vrcp.pop %v1223
    %v1226 = vrcp.pop %v1224
    %v1227 = vmul.f32 %v1215, %v1225
    %v1228 = vmul.f32 %v1216, %v1226
    %v1229 = vpack.c.bf16 %v1228, %v1227
    %v1230 = vpack.c.bf16 %v1148, %v1144
    %v1232 = vsel %vm386, %v1229, 0
    %1234 = vmatprep.subr.bf16.mxu0 0
    %1235 = vmatpush1.bf16.msra.mxu0 %v1230
    %1236 = vmatprep.subr.bf16.mxu0 0
    %1237 = vmatpush1.bf16.msra.mxu0 0
    %1238 = vmatprep.subr.bf16.mxu0 0
    %1239 = vmatpush1.bf16.msra.mxu0 0
    %1240 = vmatprep.subr.bf16.mxu0 0
    %1241 = vmatpush1.bf16.msra.mxu0 0
    %1242 = vmatprep.subr.bf16.mxu0 0
    %1243 = vmatpush1.bf16.msra.mxu0 0
    %1244 = vmatprep.subr.bf16.mxu0 0
    %1245 = vmatpush1.bf16.msra.mxu0 0
    %1246 = vmatprep.subr.bf16.mxu0 0
    %1247 = vmatpush1.bf16.msra.mxu0 0
    %1248 = vmatprep.subr.bf16.mxu0 0
    %1249 = vmatpush1.bf16.msra.mxu0 0
    %1250 = vmatprep.subr.bf16.mxu0 0
    %1251 = vmatpush1.bf16.msra.mxu0 0
    %1252 = vmatprep.subr.bf16.mxu0 0
    %1253 = vmatpush1.bf16.msra.mxu0 0
    %1254 = vmatprep.subr.bf16.mxu0 0
    %1255 = vmatpush1.bf16.msra.mxu0 0
    %1256 = vmatprep.subr.bf16.mxu0 0
    %1257 = vmatpush1.bf16.msra.mxu0 0
    %1258 = vmatprep.subr.bf16.mxu0 0
    %1259 = vmatpush1.bf16.msra.mxu0 0
    %1260 = vmatprep.subr.bf16.mxu0 0
    %1261 = vmatpush1.bf16.msra.mxu0 0
    %1262 = vmatprep.subr.bf16.mxu0 0
    %1263 = vmatpush1.bf16.msra.mxu0 0
    %1264 = vmatprep.subr.bf16.mxu0 0
    %1265 = vmatpush1.bf16.msra.mxu0 0
    %1266 = vmatprep.mubr.bf16.mxu0 0
    %1267 = vmatmul.mubr.bf16.gmra.mrb[0].mxu0 %v1232
    %v1268 = vpop.f32.mrb[0].mxu0
    %v1269 = vadd.f32 %v1146, %v1268
    %v1270 = vpop.f32.mrb[0].mxu0
    %v1271 = vpop.f32.mrb[0].mxu0
    %v1272 = vadd.f32 %v1150, %v1271
    %v1273 = vpop.f32.mrb[0].mxu0
    %1274 = vdwg.mxu0
    %1275 = vst [vmem:[%s25] sm:$0xff] %v1269
    %1276 = vst [vmem:[%s25 + $0x8] sm:$0xff] %v1272
    %v1277 = vld [vmem:[#allocation13] sm:$0xf]
    %v1278 = vld [vmem:[#allocation13 + $0x4] sm:$0xf]
    %1279 = vxpose.xlu0.c.b16.start [1/8] %v879, 128
    %1280 = vxpose.xlu0.c.b16.cont [2/8] 0, 128
    %1281 = vxpose.xlu0.c.b16.cont [3/8] 0, 128
    %1282 = vxpose.xlu0.c.b16.cont [4/8] 0, 128
    %1283 = vxpose.xlu0.c.b16.cont [5/8] 0, 128
    %1284 = vxpose.xlu0.c.b16.cont [6/8] 0, 128
    %1285 = vxpose.xlu0.c.b16.cont [7/8] 0, 128
    %1286 = vxpose.xlu0.c.b16.end [8/8] 0, 128
    %v1287 = vpop.trf.xlu0
    %v1288 = vpop.trf.xlu0
    %v1289 = vpop.trf.xlu0
    %v1290 = vpop.trf.xlu0
    %v1291 = vpop.trf.xlu0
    %v1292 = vpop.trf.xlu0
    %v1293 = vpop.trf.xlu0
    %v1294 = vpop.trf.xlu0
    %v1297 = vunpack.c.l.b16 %v1277
    %v1298 = vunpack.c.l.b16 %v1278
    %v1299 = vpack.c.b16 %v1298, %v1297
    %v1302 = vsel %vm386, %v1287, 0
    %v1305 = vsel %vm386, %v1288, 0
    %1307 = vmatprep.subr.bf16.mxu0 0
    %1308 = vmatpush1.bf16.msra.mxu0 %v1299
    %1309 = vmatprep.subr.bf16.mxu0 0
    %1310 = vmatpush1.bf16.msra.mxu0 0
    %1311 = vmatprep.subr.bf16.mxu0 0
    %1312 = vmatpush1.bf16.msra.mxu0 0
    %1313 = vmatprep.subr.bf16.mxu0 0
    %1314 = vmatpush1.bf16.msra.mxu0 0
    %1315 = vmatprep.subr.bf16.mxu0 0
    %1316 = vmatpush1.bf16.msra.mxu0 0
    %1317 = vmatprep.subr.bf16.mxu0 0
    %1318 = vmatpush1.bf16.msra.mxu0 0
    %1319 = vmatprep.subr.bf16.mxu0 0
    %1320 = vmatpush1.bf16.msra.mxu0 0
    %1321 = vmatprep.subr.bf16.mxu0 0
    %1322 = vmatpush1.bf16.msra.mxu0 0
    %1323 = vmatprep.subr.bf16.mxu0 0
    %1324 = vmatpush1.bf16.msra.mxu0 0
    %1325 = vmatprep.subr.bf16.mxu0 0
    %1326 = vmatpush1.bf16.msra.mxu0 0
    %1327 = vmatprep.subr.bf16.mxu0 0
    %1328 = vmatpush1.bf16.msra.mxu0 0
    %1329 = vmatprep.subr.bf16.mxu0 0
    %1330 = vmatpush1.bf16.msra.mxu0 0
    %1331 = vmatprep.subr.bf16.mxu0 0
    %1332 = vmatpush1.bf16.msra.mxu0 0
    %1333 = vmatprep.subr.bf16.mxu0 0
    %1334 = vmatpush1.bf16.msra.mxu0 0
    %1335 = vmatprep.subr.bf16.mxu0 0
    %1336 = vmatpush1.bf16.msra.mxu0 0
    %1337 = vmatprep.subr.bf16.mxu0 0
    %1338 = vmatpush1.bf16.msra.mxu0 0
    %1339 = vmatprep.mubr.bf16.mxu0 0
    %1340 = vmatmul.mubr.bf16.gmra.mrb[0].mxu0 %v1302
    %v1341 = vpop.f32.mrb[0].mxu0
    %v1342 = vadd.f32 0.0, %v1341
    %v1343 = vpop.f32.mrb[0].mxu0
    %v1344 = vpop.f32.mrb[0].mxu0
    %v1345 = vadd.f32 0.0, %v1344
    %v1346 = vpop.f32.mrb[0].mxu0
    %1347 = vmatprep.mubr.bf16.mxu0 0
    %1348 = vmatmul.mubr.bf16.gmra.mrb[0].mxu0 %v1305
    %v1349 = vpop.f32.mrb[0].mxu0
    %v1350 = vadd.f32 0.0, %v1349
    %v1351 = vpop.f32.mrb[0].mxu0
    %v1352 = vpop.f32.mrb[0].mxu0
    %v1353 = vpop.f32.mrb[0].mxu0
    %1354 = vdwg.mxu0
    %v1355 = vpack.c.bf16 %v1345, %v1342
    %v1356 = vpack.c.bf16 %v1350, %v1350
    %v1357 = vld [vmem:[#allocation15] sm:$0x1]
    %v1359 = vlaneseq
    %v1360 = vshrl.u32 %v1359, 7
    %v1361 = vsub.s32 0, %v1360
    %v1362 = vrot.slane %v1357, %v1361
    %v1365 = vsel %vm310, %v1356, 0
    %1367 = vmatprep.subr.bf16.mxu0 0
    %1368 = vmatpush1.bf16.msra.mxu0 %v1355
    %1369 = vmatprep.subr.bf16.mxu0 0
    %1370 = vmatpush1.bf16.msra.mxu0 %v1365
    %1371 = vmatprep.subr.bf16.mxu0 0
    %1372 = vmatpush1.bf16.msra.mxu0 0
    %1373 = vmatprep.subr.bf16.mxu0 0
    %1374 = vmatpush1.bf16.msra.mxu0 0
    %1375 = vmatprep.subr.bf16.mxu0 0
    %1376 = vmatpush1.bf16.msra.mxu0 0
    %1377 = vmatprep.subr.bf16.mxu0 0
    %1378 = vmatpush1.bf16.msra.mxu0 0
    %1379 = vmatprep.subr.bf16.mxu0 0
    %1380 = vmatpush1.bf16.msra.mxu0 0
    %1381 = vmatprep.subr.bf16.mxu0 0
    %1382 = vmatpush1.bf16.msra.mxu0 0
    %1383 = vmatprep.subr.bf16.mxu0 0
    %1384 = vmatpush1.bf16.msra.mxu0 0
    %1385 = vmatprep.subr.bf16.mxu0 0
    %1386 = vmatpush1.bf16.msra.mxu0 0
    %1387 = vmatprep.subr.bf16.mxu0 0
    %1388 = vmatpush1.bf16.msra.mxu0 0
    %1389 = vmatprep.subr.bf16.mxu0 0
    %1390 = vmatpush1.bf16.msra.mxu0 0
    %1391 = vmatprep.subr.bf16.mxu0 0
    %1392 = vmatpush1.bf16.msra.mxu0 0
    %1393 = vmatprep.subr.bf16.mxu0 0
    %1394 = vmatpush1.bf16.msra.mxu0 0
    %1395 = vmatprep.subr.bf16.mxu0 0
    %1396 = vmatpush1.bf16.msra.mxu0 0
    %1397 = vmatprep.subr.bf16.mxu0 0
    %1398 = vmatpush1.bf16.msra.mxu0 0
    %1399 = vmatprep.mubr.bf16.mxu0 0
    %1400 = vmatmul.mubr.bf16.gmra.mrb[0].mxu0 %v454
    %v1401 = vpop.f32.mrb[0].mxu0
    %v1402 = vadd.f32 %v1362, %v1401
    %v1403 = vpop.f32.mrb[0].mxu0
    %v1404 = vpop.f32.mrb[0].mxu0
    %v1405 = vadd.f32 %v1362, %v1404
    %v1406 = vpop.f32.mrb[0].mxu0
    %1407 = vmatprep.mubr.bf16.mxu0 0
    %1408 = vmatmul.mubr.bf16.gmra.mrb[0].mxu0 %v457
    %v1409 = vpop.f32.mrb[0].mxu0
    %v1410 = vadd.f32 %v1362, %v1409
    %v1411 = vpop.f32.mrb[0].mxu0
    %v1412 = vpop.f32.mrb[0].mxu0
    %v1413 = vpop.f32.mrb[0].mxu0
    %1414 = vdwg.mxu0
    %vm1415 = vcmp.ge.f32.partialorder %v1402, 0.0
    %vm1416 = vcmp.ge.f32.partialorder %v1405, 0.0
    %vm1417 = vcmp.ge.f32.partialorder %v1410, 0.0
    %v1418 = vmul.f32 %v1402, 0.01
    %v1419 = vmul.f32 %v1405, 0.01
    %v1420 = vmul.f32 %v1410, 0.01
    %v1421 = vsel %vm1415, %v1402, %v1418
    %v1422 = vsel %vm1416, %v1405, %v1419
    %v1423 = vsel %vm1417, %v1410, %v1420
    %v1424 = vld [vmem:[%s17] sm:$0xff]
    %v1425 = vld [vmem:[%s17 + $0x8] sm:$0xff]
    %v1426 = vld [vmem:[%s17 + $0x10] sm:$0xff]
    %v1427 = vld [vmem:[%s17 + $0x18] sm:$0xff]
    %v1428 = vld [vmem:[%s17 + $0x20] sm:$0xff]
    %v1429 = vld [vmem:[%s17 + $0x28] sm:$0xff]
    %v1430 = vld [vmem:[%s17 + $0x30] sm:$0xff]
    %v1431 = vld [vmem:[%s17 + $0x38] sm:$0xff]
    %v1432 = vpack.c.bf16 %v1422, %v1421
    %v1433 = vpack.c.bf16 %v1423, %v1423
    %v1434 = vld [vmem:[#allocation16] sm:$0xf]
    %v1436 = vlaneseq
    %v1437 = vshrl.u32 %v1436, 7
    %v1438 = vsub.s32 0, %v1437
    %v1439 = vrot.slane %v1434, %v1438
    %v1440 = vlaneseq
    %v1441 = vshrl.u32 %v1440, 7
    %v1442 = vsub.s32 1, %v1441
    %v1443 = vrot.slane %v1434, %v1442
    %v1444 = vlaneseq
    %v1445 = vshrl.u32 %v1444, 7
    %v1446 = vsub.s32 2, %v1445
    %v1447 = vrot.slane %v1434, %v1446
    %v1448 = vlaneseq
    %v1449 = vshrl.u32 %v1448, 7
    %v1450 = vsub.s32 3, %v1449
    %v1451 = vrot.slane %v1434, %v1450
    %v1464 = vunpack.c.l.b16 %v1424
    %v1465 = vunpack.c.h.b16 %v1424
    %v1466 = vunpack.c.l.b16 %v1425
    %v1467 = vunpack.c.h.b16 %v1425
    %v1468 = vunpack.c.l.b16 %v1426
    %v1469 = vunpack.c.h.b16 %v1426
    %v1470 = vunpack.c.l.b16 %v1427
    %v1471 = vunpack.c.h.b16 %v1427
    %v1472 = vunpack.c.l.b16 %v1428
    %v1473 = vunpack.c.h.b16 %v1428
    %v1474 = vunpack.c.l.b16 %v1429
    %v1475 = vunpack.c.h.b16 %v1429
    %v1476 = vunpack.c.l.b16 %v1430
    %v1477 = vunpack.c.h.b16 %v1430
    %v1478 = vunpack.c.l.b16 %v1431
    %v1479 = vunpack.c.h.b16 %v1431
    %v1480 = vpack.c.b16 %v1468, %v1464
    %v1481 = vpack.c.b16 %v1469, %v1465
    %v1482 = vpack.c.b16 %v1470, %v1466
    %v1483 = vpack.c.b16 %v1471, %v1467
    %v1484 = vpack.c.b16 %v1476, %v1472
    %v1485 = vpack.c.b16 %v1477, %v1473
    %v1486 = vpack.c.b16 %v1478, %v1474
    %v1487 = vpack.c.b16 %v1479, %v1475
    %v1497 = vsel %vm1062, %v1432, 0
    %v1500 = vsel %vm1062, %v1433, 0
    %1502 = vmatprep.subr.bf16.mxu0 %v1481
    %1503 = vmatpush1.bf16.msra.mxu0 %v1480
    %1504 = vmatprep.subr.bf16.mxu0 %v1485
    %1505 = vmatpush1.bf16.msra.mxu0 %v1484
    %1506 = vmatprep.subr.bf16.mxu0 0
    %1507 = vmatpush1.bf16.msra.mxu0 0
    %1508 = vmatprep.subr.bf16.mxu0 0
    %1509 = vmatpush1.bf16.msra.mxu0 0
    %1510 = vmatprep.subr.bf16.mxu0 0
    %1511 = vmatpush1.bf16.msra.mxu0 0
    %1512 = vmatprep.subr.bf16.mxu0 0
    %1513 = vmatpush1.bf16.msra.mxu0 0
    %1514 = vmatprep.subr.bf16.mxu0 0
    %1515 = vmatpush1.bf16.msra.mxu0 0
    %1516 = vmatprep.subr.bf16.mxu0 0
    %1517 = vmatpush1.bf16.msra.mxu0 0
    %1518 = vmatprep.subr.bf16.mxu0 0
    %1519 = vmatpush1.bf16.msra.mxu0 0
    %1520 = vmatprep.subr.bf16.mxu0 0
    %1521 = vmatpush1.bf16.msra.mxu0 0
    %1522 = vmatprep.subr.bf16.mxu0 0
    %1523 = vmatpush1.bf16.msra.mxu0 0
    %1524 = vmatprep.subr.bf16.mxu0 0
    %1525 = vmatpush1.bf16.msra.mxu0 0
    %1526 = vmatprep.subr.bf16.mxu0 0
    %1527 = vmatpush1.bf16.msra.mxu0 0
    %1528 = vmatprep.subr.bf16.mxu0 0
    %1529 = vmatpush1.bf16.msra.mxu0 0
    %1530 = vmatprep.subr.bf16.mxu0 0
    %1531 = vmatpush1.bf16.msra.mxu0 0
    %1532 = vmatprep.subr.bf16.mxu0 0
    %1533 = vmatpush1.bf16.msra.mxu0 0
    %1534 = vmatprep.mubr.bf16.mxu0 0
    %1535 = vmatmul.mubr.bf16.gmra.mrb[0].mxu0 %v1497
    %v1536 = vpop.f32.mrb[0].mxu0
    %v1537 = vadd.f32 %v1439, %v1536
    %v1538 = vpop.f32.mrb[0].mxu0
    %v1539 = vadd.f32 %v1443, %v1538
    %v1540 = vpop.f32.mrb[0].mxu0
    %v1541 = vadd.f32 %v1439, %v1540
    %v1542 = vpop.f32.mrb[0].mxu0
    %v1543 = vadd.f32 %v1443, %v1542
    %1544 = vmatprep.mubr.bf16.mxu0 0
    %1545 = vmatmul.mubr.bf16.gmra.mrb[0].mxu0 %v1500
    %v1546 = vpop.f32.mrb[0].mxu0
    %v1547 = vadd.f32 %v1439, %v1546
    %v1548 = vpop.f32.mrb[0].mxu0
    %v1549 = vadd.f32 %v1443, %v1548
    %v1550 = vpop.f32.mrb[0].mxu0
    %v1551 = vpop.f32.mrb[0].mxu0
    %1552 = vdwg.mxu0
    %1553 = vmatprep.subr.bf16.mxu0 %v1483
    %1554 = vmatpush1.bf16.msra.mxu0 %v1482
    %1555 = vmatprep.subr.bf16.mxu0 %v1487
    %1556 = vmatpush1.bf16.msra.mxu0 %v1486
    %1557 = vmatprep.subr.bf16.mxu0 0
    %1558 = vmatpush1.bf16.msra.mxu0 0
    %1559 = vmatprep.subr.bf16.mxu0 0
    %1560 = vmatpush1.bf16.msra.mxu0 0
    %1561 = vmatprep.subr.bf16.mxu0 0
    %1562 = vmatpush1.bf16.msra.mxu0 0
    %1563 = vmatprep.subr.bf16.mxu0 0
    %1564 = vmatpush1.bf16.msra.mxu0 0
    %1565 = vmatprep.subr.bf16.mxu0 0
    %1566 = vmatpush1.bf16.msra.mxu0 0
    %1567 = vmatprep.subr.bf16.mxu0 0
    %1568 = vmatpush1.bf16.msra.mxu0 0
    %1569 = vmatprep.subr.bf16.mxu0 0
    %1570 = vmatpush1.bf16.msra.mxu0 0
    %1571 = vmatprep.subr.bf16.mxu0 0
    %1572 = vmatpush1.bf16.msra.mxu0 0
    %1573 = vmatprep.subr.bf16.mxu0 0
    %1574 = vmatpush1.bf16.msra.mxu0 0
    %1575 = vmatprep.subr.bf16.mxu0 0
    %1576 = vmatpush1.bf16.msra.mxu0 0
    %1577 = vmatprep.subr.bf16.mxu0 0
    %1578 = vmatpush1.bf16.msra.mxu0 0
    %1579 = vmatprep.subr.bf16.mxu0 0
    %1580 = vmatpush1.bf16.msra.mxu0 0
    %1581 = vmatprep.subr.bf16.mxu0 0
    %1582 = vmatpush1.bf16.msra.mxu0 0
    %1583 = vmatprep.subr.bf16.mxu0 0
    %1584 = vmatpush1.bf16.msra.mxu0 0
    %1585 = vmatprep.mubr.bf16.mxu0 0
    %1586 = vmatmul.mubr.bf16.gmra.mrb[0].mxu0 %v1497
    %v1587 = vpop.f32.mrb[0].mxu0
    %v1588 = vadd.f32 %v1447, %v1587
    %v1589 = vpop.f32.mrb[0].mxu0
    %v1590 = vadd.f32 %v1451, %v1589
    %v1591 = vpop.f32.mrb[0].mxu0
    %v1592 = vadd.f32 %v1447, %v1591
    %v1593 = vpop.f32.mrb[0].mxu0
    %v1594 = vadd.f32 %v1451, %v1593
    %1595 = vmatprep.mubr.bf16.mxu0 0
    %1596 = vmatmul.mubr.bf16.gmra.mrb[0].mxu0 %v1500
    %v1597 = vpop.f32.mrb[0].mxu0
    %v1598 = vadd.f32 %v1447, %v1597
    %v1599 = vpop.f32.mrb[0].mxu0
    %v1600 = vadd.f32 %v1451, %v1599
    %v1601 = vpop.f32.mrb[0].mxu0
    %v1602 = vpop.f32.mrb[0].mxu0
    %1603 = vdwg.mxu0
    %v1604 = vpack.c.bf16 %v1541, %v1537
    %v1605 = vpack.c.bf16 %v1547, %v1547
    %v1606 = vpack.c.bf16 %v1543, %v1539
    %v1607 = vpack.c.bf16 %v1549, %v1549
    %1608 = vmatprep.subr.bf16.mxu0 0
    %1609 = vmatpush1.bf16.xpose.msra.mxu0 %v1606
    %1610 = vmatprep.subr.bf16.mxu0 0
    %1611 = vmatpush1.bf16.xpose.msra.mxu0 %v1607
    %1612 = vmatprep.subr.bf16.mxu0 0
    %1613 = vmatpush1.bf16.xpose.msra.mxu0 0
    %1614 = vmatprep.subr.bf16.mxu0 0
    %1615 = vmatpush1.bf16.xpose.msra.mxu0 0
    %1616 = vmatprep.subr.bf16.mxu0 0
    %1617 = vmatpush1.bf16.xpose.msra.mxu0 0
    %1618 = vmatprep.subr.bf16.mxu0 0
    %1619 = vmatpush1.bf16.xpose.msra.mxu0 0
    %1620 = vmatprep.subr.bf16.mxu0 0
    %1621 = vmatpush1.bf16.xpose.msra.mxu0 0
    %1622 = vmatprep.subr.bf16.mxu0 0
    %1623 = vmatpush1.bf16.xpose.msra.mxu0 0
    %1624 = vmatprep.subr.bf16.mxu0 0
    %1625 = vmatpush1.bf16.xpose.msra.mxu0 0
    %1626 = vmatprep.subr.bf16.mxu0 0
    %1627 = vmatpush1.bf16.xpose.msra.mxu0 0
    %1628 = vmatprep.subr.bf16.mxu0 0
    %1629 = vmatpush1.bf16.xpose.msra.mxu0 0
    %1630 = vmatprep.subr.bf16.mxu0 0
    %1631 = vmatpush1.bf16.xpose.msra.mxu0 0
    %1632 = vmatprep.subr.bf16.mxu0 0
    %1633 = vmatpush1.bf16.xpose.msra.mxu0 0
    %1634 = vmatprep.subr.bf16.mxu0 0
    %1635 = vmatpush1.bf16.xpose.msra.mxu0 0
    %1636 = vmatprep.subr.bf16.mxu0 0
    %1637 = vmatpush1.bf16.xpose.msra.mxu0 0
    %1638 = vmatprep.subr.bf16.mxu0 0
    %1639 = vmatpush1.bf16.xpose.msra.mxu0 0
    %1640 = vmatprep.mubr.bf16.mxu0 0
    %1641 = vmatmul.mubr.bf16.gmra.mrb[0].mxu0 %v1604
    %v1642 = vpop.f32.mrb[0].mxu0
    %v1643 = vadd.f32 0.0, %v1642
    %v1644 = vpop.f32.mrb[0].mxu0
    %v1645 = vpop.f32.mrb[0].mxu0
    %v1646 = vadd.f32 0.0, %v1645
    %v1647 = vpop.f32.mrb[0].mxu0
    %1648 = vmatprep.mubr.bf16.mxu0 0
    %1649 = vmatmul.mubr.bf16.gmra.mrb[0].mxu0 %v1605
    %v1650 = vpop.f32.mrb[0].mxu0
    %v1651 = vadd.f32 0.0, %v1650
    %v1652 = vpop.f32.mrb[0].mxu0
    %v1653 = vpop.f32.mrb[0].mxu0
    %v1654 = vpop.f32.mrb[0].mxu0
    %1655 = vdwg.mxu0
    %v1656 = vmul.f32 %v1643, 0.35355338
    %v1657 = vmul.f32 %v1646, 0.35355338
    %v1658 = vmul.f32 %v1651, 0.35355338
    %v1659 = vmul.f32 %v1656, %v277
    %v1660 = vmul.f32 %v1657, %v278
    %v1661 = vmul.f32 %v1658, %v279
    %v1662 = vsel %vm306, %v1659, 0.0
    %v1663 = vsel %vm306, %v1660, 0.0
    %v1664 = vadd.f32 %v1662, %v1663
    %v1665 = vsel %vm306, %v1661, 0.0
    %v1666 = vadd.f32 %v1664, %v1665
    %1667 = vadd.xlane.f32.xlu0 %v1666
    %v1668 = vpop.xlane.xlu0 %1667
    %v1669 = vrot.slane %v1668, 4
    %v1670 = vadd.f32 %v1668, %v1669
    %v1671 = vrot.slane %v1670, 2
    %v1672 = vadd.f32 %v1670, %v1671
    %v1673 = vrot.slane %v1672, 1
    %v1674 = vadd.f32 %v1672, %v1673
    %s1675 = vtos %v1674
    %s1676 = smul.f32 %s1675, 0.020833334
    %v1677 = vstv %s1676
    %v1678 = vsub.f32 %v1656, %v1677
    %v1679 = vsub.f32 %v1657, %v1677
    %v1680 = vsub.f32 %v1658, %v1677
    %v1681 = vmul.f32 %v1678, %v1678
    %v1682 = vmul.f32 %v1679, %v1679
    %v1683 = vmul.f32 %v1680, %v1680
    %v1684 = vmul.f32 %v277, %v1681
    %v1685 = vmul.f32 %v278, %v1682
    %v1686 = vmul.f32 %v279, %v1683
    %v1687 = vsel %vm306, %v1684, 0.0
    %v1688 = vsel %vm306, %v1685, 0.0
    %v1689 = vadd.f32 %v1687, %v1688
    %v1690 = vsel %vm306, %v1686, 0.0
    %v1691 = vadd.f32 %v1689, %v1690
    %1692 = vadd.xlane.f32.xlu0 %v1691
    %v1693 = vpop.xlane.xlu0 %1692
    %v1694 = vrot.slane %v1693, 4
    %v1695 = vadd.f32 %v1693, %v1694
    %v1696 = vrot.slane %v1695, 2
    %v1697 = vadd.f32 %v1695, %v1696
    %v1698 = vrot.slane %v1697, 1
    %v1699 = vadd.f32 %v1697, %v1698
    %s1700 = vtos %v1699
    %s1701 = smul.f32 %s1700, 0.021276595
    %s1702 = smax.f32 %s1701, 1e-12
    %v1703 = vstv %s1702
    %v1704 = vrsqrt.pop %v1703
    %s1705 = vtos %v1704
    %s1706 = smul.f32 %s1705, 1.5
    %v1707 = vstv %s1706
    %v1708 = vmul.f32 %v1656, %v1707
    %v1709 = vmul.f32 %v1657, %v1707
    %v1710 = vmul.f32 %v1658, %v1707
    %v1711 = vsub.f32 0.0, %v1708
    %v1712 = vsub.f32 0.0, %v1709
    %v1713 = vsub.f32 0.0, %v1710
    %v1714 = vmul.f32 %v1711, 1.442695
    %v1715 = vpow.pop %v1714
    %v1716 = vmul.f32 %v1712, 1.442695
    %v1717 = vpow.pop %v1716
    %v1718 = vmul.f32 %v1713, 1.442695
    %v1719 = vpow.pop %v1718
    %v1720 = vadd.f32 %v1715, 1.0
    %v1721 = vadd.f32 %v1717, 1.0
    %v1722 = vadd.f32 %v1719, 1.0
    %v1723 = vrcp.pop %v1720
    %v1724 = vrcp.pop %v1721
    %v1725 = vrcp.pop %v1722
    %v1726 = vmul.f32 %v277, %v1723
    %v1727 = vmul.f32 %v278, %v1724
    %v1728 = vmul.f32 %v279, %v1725
    %v1729 = vpack.c.bf16 %v1727, %v1726
    %v1730 = vpack.c.bf16 %v1728, %v1728
    %v1731 = vpack.c.bf16 %v1592, %v1588
    %v1732 = vpack.c.bf16 %v1598, %v1598
    %v1734 = vsel %vm306, %v1729, 0
    %v1737 = vsel %vm306, %v1730, 0
    %v1740 = vsel %vm310, %v1732, 0
    %1742 = vmatprep.subr.bf16.mxu0 0
    %1743 = vmatpush1.bf16.msra.mxu0 %v1731
    %1744 = vmatprep.subr.bf16.mxu0 0
    %1745 = vmatpush1.bf16.msra.mxu0 %v1740
    %1746 = vmatprep.subr.bf16.mxu0 0
    %1747 = vmatpush1.bf16.msra.mxu0 0
    %1748 = vmatprep.subr.bf16.mxu0 0
    %1749 = vmatpush1.bf16.msra.mxu0 0
    %1750 = vmatprep.subr.bf16.mxu0 0
    %1751 = vmatpush1.bf16.msra.mxu0 0
    %1752 = vmatprep.subr.bf16.mxu0 0
    %1753 = vmatpush1.bf16.msra.mxu0 0
    %1754 = vmatprep.subr.bf16.mxu0 0
    %1755 = vmatpush1.bf16.msra.mxu0 0
    %1756 = vmatprep.subr.bf16.mxu0 0
    %1757 = vmatpush1.bf16.msra.mxu0 0
    %1758 = vmatprep.subr.bf16.mxu0 0
    %1759 = vmatpush1.bf16.msra.mxu0 0
    %1760 = vmatprep.subr.bf16.mxu0 0
    %1761 = vmatpush1.bf16.msra.mxu0 0
    %1762 = vmatprep.subr.bf16.mxu0 0
    %1763 = vmatpush1.bf16.msra.mxu0 0
    %1764 = vmatprep.subr.bf16.mxu0 0
    %1765 = vmatpush1.bf16.msra.mxu0 0
    %1766 = vmatprep.subr.bf16.mxu0 0
    %1767 = vmatpush1.bf16.msra.mxu0 0
    %1768 = vmatprep.subr.bf16.mxu0 0
    %1769 = vmatpush1.bf16.msra.mxu0 0
    %1770 = vmatprep.subr.bf16.mxu0 0
    %1771 = vmatpush1.bf16.msra.mxu0 0
    %1772 = vmatprep.subr.bf16.mxu0 0
    %1773 = vmatpush1.bf16.msra.mxu0 0
    %1774 = vmatprep.mubr.bf16.mxu0 0
    %1775 = vmatmul.mubr.bf16.gmra.mrb[0].mxu0 %v1734
    %v1776 = vpop.f32.mrb[0].mxu0
    %v1777 = vadd.f32 %v1590, %v1776
    %v1778 = vpop.f32.mrb[0].mxu0
    %v1779 = vpop.f32.mrb[0].mxu0
    %v1780 = vadd.f32 %v1594, %v1779
    %v1781 = vpop.f32.mrb[0].mxu0
    %1782 = vmatprep.mubr.bf16.mxu0 0
    %1783 = vmatmul.mubr.bf16.gmra.mrb[0].mxu0 %v1737
    %v1784 = vpop.f32.mrb[0].mxu0
    %v1785 = vadd.f32 %v1600, %v1784
    %v1786 = vpop.f32.mrb[0].mxu0
    %v1787 = vpop.f32.mrb[0].mxu0
    %v1788 = vpop.f32.mrb[0].mxu0
    %1789 = vdwg.mxu0
    %v1790 = vld [vmem:[%s19] sm:$0xf]
    %v1791 = vld [vmem:[%s19 + $0x4] sm:$0xf]
    %v1792 = vld [vmem:[%s19 + $0x8] sm:$0xf]
    %v1793 = vld [vmem:[%s19 + $0xc] sm:$0xf]
    %v1794 = vld [vmem:[%s19 + $0x10] sm:$0xf]
    %v1795 = vld [vmem:[%s19 + $0x14] sm:$0xf]
    %v1796 = vld [vmem:[%s19 + $0x18] sm:$0xf]
    %v1797 = vld [vmem:[%s19 + $0x1c] sm:$0xf]
    %v1798 = vld [vmem:[%s19 + $0x20] sm:$0xf]
    %v1799 = vld [vmem:[%s19 + $0x24] sm:$0xf]
    %v1800 = vld [vmem:[%s19 + $0x28] sm:$0xf]
    %v1801 = vld [vmem:[%s19 + $0x2c] sm:$0xf]
    %v1802 = vld [vmem:[%s19 + $0x30] sm:$0xf]
    %v1803 = vld [vmem:[%s19 + $0x34] sm:$0xf]
    %v1804 = vld [vmem:[%s19 + $0x38] sm:$0xf]
    %v1805 = vld [vmem:[%s19 + $0x3c] sm:$0xf]
    %v1806 = vpack.c.bf16 %v1780, %v1777
    %v1807 = vpack.c.bf16 %v1785, %v1785
    %v1808 = vld [vmem:[#allocation18] sm:$0x1]
    %v1810 = vlaneseq
    %v1811 = vshrl.u32 %v1810, 7
    %v1812 = vsub.s32 0, %v1811
    %v1813 = vrot.slane %v1808, %v1812
    %v1831 = vunpack.c.l.b16 %v1790
    %v1832 = vunpack.c.l.b16 %v1791
    %v1833 = vunpack.c.l.b16 %v1792
    %v1834 = vunpack.c.l.b16 %v1793
    %v1835 = vunpack.c.l.b16 %v1794
    %v1836 = vunpack.c.l.b16 %v1795
    %v1837 = vunpack.c.l.b16 %v1796
    %v1838 = vunpack.c.l.b16 %v1797
    %v1839 = vunpack.c.l.b16 %v1798
    %v1840 = vunpack.c.l.b16 %v1799
    %v1841 = vunpack.c.l.b16 %v1800
    %v1842 = vunpack.c.l.b16 %v1801
    %v1843 = vunpack.c.l.b16 %v1802
    %v1844 = vunpack.c.l.b16 %v1803
    %v1845 = vunpack.c.l.b16 %v1804
    %v1846 = vunpack.c.l.b16 %v1805
    %v1847 = vpack.c.b16 %v1832, %v1831
    %v1848 = vpack.c.b16 %v1834, %v1833
    %v1849 = vpack.c.b16 %v1836, %v1835
    %v1850 = vpack.c.b16 %v1838, %v1837
    %v1851 = vpack.c.b16 %v1840, %v1839
    %v1852 = vpack.c.b16 %v1842, %v1841
    %v1853 = vpack.c.b16 %v1844, %v1843
    %v1854 = vpack.c.b16 %v1846, %v1845
    %1863 = vmatprep.subr.bf16.mxu0 0
    %1864 = vmatpush1.bf16.msra.mxu0 %v1847
    %1865 = vmatprep.subr.bf16.mxu0 0
    %1866 = vmatpush1.bf16.msra.mxu0 %v1848
    %1867 = vmatprep.subr.bf16.mxu0 0
    %1868 = vmatpush1.bf16.msra.mxu0 %v1849
    %1869 = vmatprep.subr.bf16.mxu0 0
    %1870 = vmatpush1.bf16.msra.mxu0 %v1850
    %1871 = vmatprep.subr.bf16.mxu0 0
    %1872 = vmatpush1.bf16.msra.mxu0 %v1851
    %1873 = vmatprep.subr.bf16.mxu0 0
    %1874 = vmatpush1.bf16.msra.mxu0 %v1852
    %1875 = vmatprep.subr.bf16.mxu0 0
    %1876 = vmatpush1.bf16.msra.mxu0 %v1853
    %1877 = vmatprep.subr.bf16.mxu0 0
    %1878 = vmatpush1.bf16.msra.mxu0 %v1854
    %1879 = vmatprep.subr.bf16.mxu0 0
    %1880 = vmatpush1.bf16.msra.mxu0 0
    %1881 = vmatprep.subr.bf16.mxu0 0
    %1882 = vmatpush1.bf16.msra.mxu0 0
    %1883 = vmatprep.subr.bf16.mxu0 0
    %1884 = vmatpush1.bf16.msra.mxu0 0
    %1885 = vmatprep.subr.bf16.mxu0 0
    %1886 = vmatpush1.bf16.msra.mxu0 0
    %1887 = vmatprep.subr.bf16.mxu0 0
    %1888 = vmatpush1.bf16.msra.mxu0 0
    %1889 = vmatprep.subr.bf16.mxu0 0
    %1890 = vmatpush1.bf16.msra.mxu0 0
    %1891 = vmatprep.subr.bf16.mxu0 0
    %1892 = vmatpush1.bf16.msra.mxu0 0
    %1893 = vmatprep.subr.bf16.mxu0 0
    %1894 = vmatpush1.bf16.msra.mxu0 0
    %1895 = vmatprep.mubr.bf16.mxu0 0
    %1896 = vmatmul.mubr.bf16.gmra.mrb[0].mxu0 %v1806
    %v1897 = vpop.f32.mrb[0].mxu0
    %v1898 = vadd.f32 %v1813, %v1897
    %v1899 = vpop.f32.mrb[0].mxu0
    %v1900 = vpop.f32.mrb[0].mxu0
    %v1901 = vadd.f32 %v1813, %v1900
    %v1902 = vpop.f32.mrb[0].mxu0
    %1903 = vmatprep.mubr.bf16.mxu0 0
    %1904 = vmatmul.mubr.bf16.gmra.mrb[0].mxu0 %v1807
    %v1905 = vpop.f32.mrb[0].mxu0
    %v1906 = vadd.f32 %v1813, %v1905
    %v1907 = vpop.f32.mrb[0].mxu0
    %v1908 = vpop.f32.mrb[0].mxu0
    %v1909 = vpop.f32.mrb[0].mxu0
    %1910 = vdwg.mxu0
    %v1911 = vmax.f32 %v1898, 0.0
    %v1912 = vmax.f32 %v1901, 0.0
    %v1913 = vmax.f32 %v1906, 0.0
    %v1914 = vld [vmem:[#allocation19] sm:$0xf]
    %v1915 = vld [vmem:[#allocation19 + $0x4] sm:$0xf]
    %v1916 = vld [vmem:[#allocation19 + $0x8] sm:$0xf]
    %v1917 = vld [vmem:[#allocation19 + $0xc] sm:$0xf]
    %v1918 = vpack.c.bf16 %v1912, %v1911
    %v1919 = vpack.c.bf16 %v1913, %v1913
    %v1920 = vld [vmem:[#allocation21] sm:$0x1]
    %v1922 = vlaneseq
    %v1923 = vshrl.u32 %v1922, 7
    %v1924 = vsub.s32 0, %v1923
    %v1925 = vrot.slane %v1920, %v1924
    %v1931 = vunpack.c.l.b16 %v1914
    %v1932 = vunpack.c.l.b16 %v1915
    %v1933 = vunpack.c.l.b16 %v1916
    %v1934 = vunpack.c.l.b16 %v1917
    %v1935 = vpack.c.b16 %v1932, %v1931
    %v1936 = vpack.c.b16 %v1934, %v1933
    %v1940 = vsel %vm1062, %v1918, 0
    %v1943 = vsel %vm1062, %v1919, 0
    %1945 = vmatprep.subr.bf16.mxu0 0
    %1946 = vmatpush1.bf16.msra.mxu0 %v1935
    %1947 = vmatprep.subr.bf16.mxu0 0
    %1948 = vmatpush1.bf16.msra.mxu0 %v1936
    %1949 = vmatprep.subr.bf16.mxu0 0
    %1950 = vmatpush1.bf16.msra.mxu0 0
    %1951 = vmatprep.subr.bf16.mxu0 0
    %1952 = vmatpush1.bf16.msra.mxu0 0
    %1953 = vmatprep.subr.bf16.mxu0 0
    %1954 = vmatpush1.bf16.msra.mxu0 0
    %1955 = vmatprep.subr.bf16.mxu0 0
    %1956 = vmatpush1.bf16.msra.mxu0 0
    %1957 = vmatprep.subr.bf16.mxu0 0
    %1958 = vmatpush1.bf16.msra.mxu0 0
    %1959 = vmatprep.subr.bf16.mxu0 0
    %1960 = vmatpush1.bf16.msra.mxu0 0
    %1961 = vmatprep.subr.bf16.mxu0 0
    %1962 = vmatpush1.bf16.msra.mxu0 0
    %1963 = vmatprep.subr.bf16.mxu0 0
    %1964 = vmatpush1.bf16.msra.mxu0 0
    %1965 = vmatprep.subr.bf16.mxu0 0
    %1966 = vmatpush1.bf16.msra.mxu0 0
    %1967 = vmatprep.subr.bf16.mxu0 0
    %1968 = vmatpush1.bf16.msra.mxu0 0
    %1969 = vmatprep.subr.bf16.mxu0 0
    %1970 = vmatpush1.bf16.msra.mxu0 0
    %1971 = vmatprep.subr.bf16.mxu0 0
    %1972 = vmatpush1.bf16.msra.mxu0 0
    %1973 = vmatprep.subr.bf16.mxu0 0
    %1974 = vmatpush1.bf16.msra.mxu0 0
    %1975 = vmatprep.subr.bf16.mxu0 0
    %1976 = vmatpush1.bf16.msra.mxu0 0
    %1977 = vmatprep.mubr.bf16.mxu0 0
    %1978 = vmatmul.mubr.bf16.gmra.mrb[0].mxu0 %v1940
    %v1979 = vpop.f32.mrb[0].mxu0
    %v1980 = vadd.f32 %v1925, %v1979
    %v1981 = vpop.f32.mrb[0].mxu0
    %v1982 = vpop.f32.mrb[0].mxu0
    %v1983 = vadd.f32 %v1925, %v1982
    %v1984 = vpop.f32.mrb[0].mxu0
    %1985 = vmatprep.mubr.bf16.mxu0 0
    %1986 = vmatmul.mubr.bf16.gmra.mrb[0].mxu0 %v1943
    %v1987 = vpop.f32.mrb[0].mxu0
    %v1988 = vadd.f32 %v1925, %v1987
    %v1989 = vpop.f32.mrb[0].mxu0
    %v1990 = vpop.f32.mrb[0].mxu0
    %v1991 = vpop.f32.mrb[0].mxu0
    %1992 = vdwg.mxu0
    %v1993 = vmax.f32 %v1980, 0.0
    %v1994 = vmax.f32 %v1983, 0.0
    %v1995 = vmax.f32 %v1988, 0.0
    %v1996 = vld [vmem:[#allocation22] sm:$0xf]
    %v1997 = vld [vmem:[#allocation22 + $0x4] sm:$0xf]
    %v1998 = vld [vmem:[#allocation22 + $0x8] sm:$0xf]
    %v1999 = vld [vmem:[#allocation22 + $0xc] sm:$0xf]
    %v2000 = vpack.c.bf16 %v1994, %v1993
    %v2001 = vpack.c.bf16 %v1995, %v1995
    %v2002 = vld [vmem:[#allocation24] sm:$0x1]
    %v2004 = vlaneseq
    %v2005 = vshrl.u32 %v2004, 7
    %v2006 = vsub.s32 0, %v2005
    %v2007 = vrot.slane %v2002, %v2006
    %v2013 = vunpack.c.l.b16 %v1996
    %v2014 = vunpack.c.l.b16 %v1997
    %v2015 = vunpack.c.l.b16 %v1998
    %v2016 = vunpack.c.l.b16 %v1999
    %v2017 = vpack.c.b16 %v2014, %v2013
    %v2018 = vpack.c.b16 %v2016, %v2015
    %v2022 = vsel %vm1062, %v2000, 0
    %v2025 = vsel %vm1062, %v2001, 0
    %2027 = vmatprep.subr.bf16.mxu0 0
    %2028 = vmatpush1.bf16.msra.mxu0 %v2017
    %2029 = vmatprep.subr.bf16.mxu0 0
    %2030 = vmatpush1.bf16.msra.mxu0 %v2018
    %2031 = vmatprep.subr.bf16.mxu0 0
    %2032 = vmatpush1.bf16.msra.mxu0 0
    %2033 = vmatprep.subr.bf16.mxu0 0
    %2034 = vmatpush1.bf16.msra.mxu0 0
    %2035 = vmatprep.subr.bf16.mxu0 0
    %2036 = vmatpush1.bf16.msra.mxu0 0
    %2037 = vmatprep.subr.bf16.mxu0 0
    %2038 = vmatpush1.bf16.msra.mxu0 0
    %2039 = vmatprep.subr.bf16.mxu0 0
    %2040 = vmatpush1.bf16.msra.mxu0 0
    %2041 = vmatprep.subr.bf16.mxu0 0
    %2042 = vmatpush1.bf16.msra.mxu0 0
    %2043 = vmatprep.subr.bf16.mxu0 0
    %2044 = vmatpush1.bf16.msra.mxu0 0
    %2045 = vmatprep.subr.bf16.mxu0 0
    %2046 = vmatpush1.bf16.msra.mxu0 0
    %2047 = vmatprep.subr.bf16.mxu0 0
    %2048 = vmatpush1.bf16.msra.mxu0 0
    %2049 = vmatprep.subr.bf16.mxu0 0
    %2050 = vmatpush1.bf16.msra.mxu0 0
    %2051 = vmatprep.subr.bf16.mxu0 0
    %2052 = vmatpush1.bf16.msra.mxu0 0
    %2053 = vmatprep.subr.bf16.mxu0 0
    %2054 = vmatpush1.bf16.msra.mxu0 0
    %2055 = vmatprep.subr.bf16.mxu0 0
    %2056 = vmatpush1.bf16.msra.mxu0 0
    %2057 = vmatprep.subr.bf16.mxu0 0
    %2058 = vmatpush1.bf16.msra.mxu0 0
    %2059 = vmatprep.mubr.bf16.mxu0 0
    %2060 = vmatmul.mubr.bf16.gmra.mrb[0].mxu0 %v2022
    %v2061 = vpop.f32.mrb[0].mxu0
    %v2062 = vadd.f32 %v2007, %v2061
    %v2063 = vpop.f32.mrb[0].mxu0
    %v2064 = vpop.f32.mrb[0].mxu0
    %v2065 = vadd.f32 %v2007, %v2064
    %v2066 = vpop.f32.mrb[0].mxu0
    %2067 = vmatprep.mubr.bf16.mxu0 0
    %2068 = vmatmul.mubr.bf16.gmra.mrb[0].mxu0 %v2025
    %v2069 = vpop.f32.mrb[0].mxu0
    %v2070 = vadd.f32 %v2007, %v2069
    %v2071 = vpop.f32.mrb[0].mxu0
    %v2072 = vpop.f32.mrb[0].mxu0
    %v2073 = vpop.f32.mrb[0].mxu0
    %2074 = vdwg.mxu0
    %v2075 = vmax.f32 %v2062, 0.0
    %v2076 = vmax.f32 %v2065, 0.0
    %v2077 = vmax.f32 %v2070, 0.0
    %2078 = vst [vmem:[%s26] sm:$0xff] %v2075
    %2079 = vst [vmem:[%s26 + $0x8] sm:$0xff] %v2076
    %2080 = vst [vmem:[%s26 + $0x10] sm:$0xff] %v2077
    // Predicated region
    $region162: #{bigraph_forward.1} parent=1 // pred_check
      _
    $region163: #{bigraph_forward.1} parent=1 // pred_check_branch
      %2082 = sbr.rel (0) target = $region165
    $region164: #{bigraph_forward.1} parent=1 // pred_region
      _
    $region165: #{bigraph_forward.1} parent=1 // pred_fallthru
      _
    // Predicated region
    $region166: #{bigraph_forward.1} parent=1 // pred_check
      _
    $region167: #{bigraph_forward.1} parent=1 // pred_check_branch
      %2084 = sbr.rel (0) target = $region169
    $region168: #{bigraph_forward.1} parent=1 // pred_region
      _
    $region169: #{bigraph_forward.1} parent=1 // pred_fallthru
      _
    // Predicated region
    $region170: #{bigraph_forward.1} parent=1 // pred_check
      _
    $region171: #{bigraph_forward.1} parent=1 // pred_check_branch
      %2086 = sbr.rel (0) target = $region173
    $region172: #{bigraph_forward.1} parent=1 // pred_region
      _
    $region173: #{bigraph_forward.1} parent=1 // pred_fallthru
      _
    // Predicated region
    $region174: #{bigraph_forward.1} parent=1 // pred_check
      _
    $region175: #{bigraph_forward.1} parent=1 // pred_check_branch
      %2088 = sbr.rel (0) target = $region177
    $region176: #{bigraph_forward.1} parent=1 // pred_region
      _
    $region177: #{bigraph_forward.1} parent=1 // pred_fallthru
      _
    %2089 = vsyncpa [#allocation3], 1
    %2090 = vsyncpa [#allocation5], 1
    %2091 = vsyncpa [#allocation8], 1
    %2092 = vsyncpa [#allocation11], 1
    %2093 = vsyncpa [#allocation14], 1
    %2094 = vsyncpa [#allocation17], 1
    %2095 = vsyncpa [#allocation20], 1
    %2096 = vsyncpa [#allocation23], 1

</llo_original>
